<compile_context>
chip_gen: v7x
topology: tpu7x:2x2x1
jax: 0.10.0
libtpu: 0.0.40
codegen_flags: <defaults>
</compile_context>

<pallas_src>
import functools

import jax
import jax.numpy as jnp
from jax.experimental import pallas as pl
from jax.experimental.pallas import tpu as pltpu


def _round_up(a, m):
    return (a + m - 1) // m * m


def gcn_kernel(x_ref, w1_ref, w2_ref, o_ref, p_ref, im_ref, *,
               k, pad, H, W, cin_p, s1r, B, lpad, seg):
    """One block of B batch elements per grid step.

    x_ref : (B, cin_p, HW)        channel-padded input, spatial on lanes
    w1_ref: (s1r, 2*k*cin_p) bf16 fused stage-1 weights (block-diagonal)
    w2_ref: (Cout, 2*k*s1r)  bf16 fused stage-2 weights (concatenated-K)
    o_ref : (B, Cout, HW)
    p_ref : (R, B*seg) f32        per-element zero-padded source buffer
    im_ref: (2*k*R, B*HW) f32     stacked im2col RHS scratch
    """
    HW = H * W
    PW = pad * W
    R = p_ref.shape[0]

    # Zero the pad stripes around every element's interior.  Done every step
    # (cheap) rather than under a program_id==0 guard, which is unsafe under a
    # megacore "parallel" grid split (second core never sees program_id 0).
    if pad > 0:
        for b in range(B):
            lo = b * seg + lpad - PW
            hi = b * seg + lpad + HW
            p_ref[:, lo:lo + PW] = jnp.zeros((R, PW), jnp.float32)
            p_ref[:, hi:hi + PW] = jnp.zeros((R, PW), jnp.float32)

    # Row-wrap lane index for the (1,k) taps, built in-kernel (no HBM mask).
    if k > 1:
        q = jax.lax.broadcasted_iota(jnp.int32, (1, HW), 1)
        col = (q & (W - 1)) if (W & (W - 1)) == 0 else (q % W)

    def build_im(rows):
        """Stacked im2col RHS:
             rows [d*rows, (d+1)*rows)       : (k,1)-conv tap d (H shift = d*W)
             rows [(k+d)*rows, (k+d+1)*rows) : (1,k)-conv tap d (W shift = d-pad,
                                               row-wrapped taps masked to zero)
           Element b occupies lanes [b*HW, (b+1)*HW).  `rows` is a multiple of 8
           so every slab store is an unmasked, sublane-aligned vst.
        """
        for d in range(k):                               # (k,1) / H taps
            for b in range(B):
                src = b * seg + lpad - PW + d * W
                im_ref[d * rows:(d + 1) * rows, b * HW:(b + 1) * HW] = (
                    p_ref[0:rows, src:src + HW])
        for d in range(k):                               # (1,k) / W taps
            sh = d - pad
            if sh == 0:
                m = None
            else:
                m = ((col + sh >= 0) & (col + sh < W)).astype(jnp.float32)
            for b in range(B):
                src = b * seg + lpad + sh
                slab = p_ref[0:rows, src:src + HW]
                if m is not None:
                    slab = slab * m
                im_ref[(k + d) * rows:(k + d + 1) * rows,
                       b * HW:(b + 1) * HW] = slab
        # bf16 at the MXU input; accumulation stays f32.
        return im_ref[0:2 * k * rows, :].astype(jnp.bfloat16)

    # ---- stage 1: fused [gcn1 (k,1)-conv ; gcn2 (1,k)-conv] -> [t1; t2] ----
    for b in range(B):
        p_ref[0:cin_p, b * seg + lpad:b * seg + lpad + HW] = (
            x_ref[b].astype(jnp.float32))
    r1 = jnp.dot(w1_ref[...], build_im(cin_p),
                 preferred_element_type=jnp.float32)         # (s1r, B*HW)

    # ---- stage 2: fused [gcn2 (k,1)-conv ; gcn1 (1,k)-conv], branch sum folded ----
    for b in range(B):
        p_ref[0:s1r, b * seg + lpad:b * seg + lpad + HW] = (
            r1[:, b * HW:(b + 1) * HW])
    acc = jnp.dot(w2_ref[...], build_im(s1r),
                  preferred_element_type=jnp.float32)        # (Cout, B*HW)

    for b in range(B):
        o_ref[b] = acc[:, b * HW:(b + 1) * HW].astype(o_ref.dtype)


def _pick_batch_block(N, per_elem_bytes, vmem_budget=8 << 20, max_block=8):
    """Largest divisor B of N with grid = N//B >= 2 (when N >= 2), bounded by
    a VMEM budget — keeps both v7x TensorCores busy while amortizing per-step
    pipeline overhead."""
    cap = max(1, min(max_block, vmem_budget // max(per_elem_bytes, 1)))
    best = 1
    for b in range(1, N + 1):
        if b > cap:
            break
        if N % b == 0 and (N < 2 or N // b >= 2):
            best = b
    return best


def gcn_forward(x_nchw, w1a, w1b, w2a, w2b, k, batch_block=None):
    """x_nchw: (N, Cin, H, W); weights stored as (tap, in_ch, out_ch).
    Returns (N, Cout, H, W)."""
    assert k % 2 == 1, "matches PyTorch 'same' output size only for odd k"
    pad = (k - 1) // 2
    N, Cin, H, W = x_nchw.shape
    Cout = w1a.shape[-1]
    HW = H * W

    # Sublane / lane alignment parameters.
    CIN_P = _round_up(Cin, 8)            # padded input channels (8-aligned)
    S1R = _round_up(2 * Cout, 8)         # stage-1 result rows [t1; t2; 0...]
    R = max(CIN_P, S1R)                  # rows of the padded source buffer
    PW = pad * W                         # lanes of H-padding actually needed
    LPAD = _round_up(PW, 128)            # 128-aligned interior start
    SEG = _round_up(LPAD + HW + PW, 128) # per-element segment in p_ref

    per_elem = (2 * k * R * HW + R * SEG) * 4 + (CIN_P + Cout) * HW * 4 * 2
    B = batch_block if batch_block is not None else _pick_batch_block(N, per_elem)
    assert N % B == 0, "batch_block must divide N"
    G = N // B

    # Channel-padded, spatially flattened input (free when Cin is already a
    # multiple of 8; tiny one-off pad otherwise).
    x_flat = x_nchw.reshape(N, Cin, HW)
    if CIN_P != Cin:
        x_flat = jnp.pad(x_flat, ((0, 0), (0, CIN_P - Cin), (0, 0)))

    # ---- fused weight matrices (zero columns for padded channels) ----
    def pad_ch(w, cp):                           # (k, C, Cout) -> (k, cp, Cout)
        return jnp.pad(w, ((0, 0), (0, cp - w.shape[1]), (0, 0)))

    # Stage 1: rows [0,Cout) = t1 (w1a on H-taps), rows [Cout,2Cout) = t2
    # (w2a on W-taps), rows [2Cout,S1R) = 0.
    w1a_m = pad_ch(w1a, CIN_P).reshape(k * CIN_P, Cout).T    # (Cout, k*CIN_P)
    w2a_m = pad_ch(w2a, CIN_P).reshape(k * CIN_P, Cout).T
    W1 = jnp.zeros((S1R, 2 * k * CIN_P), jnp.float32)
    W1 = W1.at[:Cout, :k * CIN_P].set(w1a_m)
    W1 = W1.at[Cout:2 * Cout, k * CIN_P:].set(w2a_m)

    # Stage 2: H-tap half picks t2 rows with w2b, W-tap half picks t1 rows
    # with w1b; the sum of the two branches falls out of the single matmul.
    w2b_p = jnp.zeros((k, S1R, Cout), jnp.float32).at[:, Cout:2 * Cout, :].set(w2b)
    w1b_p = jnp.zeros((k, S1R, Cout), jnp.float32).at[:, :Cout, :].set(w1b)
    W2 = jnp.concatenate([w2b_p.reshape(k * S1R, Cout),
                          w1b_p.reshape(k * S1R, Cout)], axis=0).T  # (Cout, 2*k*S1R)

    W1 = W1.astype(jnp.bfloat16)
    W2 = W2.astype(jnp.bfloat16)

    kernel = functools.partial(gcn_kernel, k=k, pad=pad, H=H, W=W,
                               cin_p=CIN_P, s1r=S1R, B=B, lpad=LPAD, seg=SEG)

    out_flat = pl.pallas_call(
        kernel,
        out_shape=jax.ShapeDtypeStruct((N, Cout, HW), x_nchw.dtype),
        grid_spec=pltpu.PrefetchScalarGridSpec(
            num_scalar_prefetch=0,
            grid=(G,),
            in_specs=[
                pl.BlockSpec((B, CIN_P, HW), lambda g: (g, 0, 0)),
                pl.BlockSpec((S1R, 2 * k * CIN_P), lambda g: (0, 0)),
                pl.BlockSpec((Cout, 2 * k * S1R), lambda g: (0, 0)),
            ],
            out_specs=pl.BlockSpec((B, Cout, HW), lambda g: (g, 0, 0)),
            scratch_shapes=[
                pltpu.VMEM((R, B * SEG), jnp.float32),        # padded source
                pltpu.VMEM((2 * k * R, B * HW), jnp.float32),  # im2col RHS
            ],
        ),
        compiler_params=pltpu.CompilerParams(
            dimension_semantics=("parallel",)),
    )(x_flat, W1, W2)

    return out_flat.reshape(N, Cout, H, W)


# ---------------- pure-JAX reference (lax.conv) for validation ----------------
def _ref_conv(x, w_tap_io, kh, kw, pad):
    # w_tap_io: (k, Cin, Cout)  ->  torch OIHW: (Cout, Cin, kh, kw)
    if kh > 1:
        w = jnp.transpose(w_tap_io, (2, 1, 0))[:, :, :, None]
        padding = [(pad, pad), (0, 0)]
    else:
        w = jnp.transpose(w_tap_io, (2, 1, 0))[:, :, None, :]
        padding = [(0, 0), (pad, pad)]
    return jax.lax.conv_general_dilated(
        x, w, window_strides=(1, 1), padding=padding,
        dimension_numbers=("NCHW", "OIHW", "NCHW"))


def gcn_reference(x, w1a, w1b, w2a, w2b, k):
    pad = (k - 1) // 2
    g1 = _ref_conv(_ref_conv(x, w1a, k, 1, pad), w1b, 1, k, pad)
    g2 = _ref_conv(_ref_conv(x, w2a, 1, k, pad), w2b, k, 1, pad)
    return g1 + g2


if __name__ == "__main__":
    def run_case(N, Cin, Cout, H, W, k):
        key = jax.random.PRNGKey(0)
        kx, k1a, k1b, k2a, k2b = jax.random.split(key, 5)
        x = jax.random.normal(kx, (N, Cin, H, W), dtype=jnp.float32)
        # conv taps stored as (tap, in_channel, out_channel)
        w1a = 0.1 * jax.random.normal(k1a, (k, Cin, Cout), dtype=jnp.float32)
        w1b = 0.1 * jax.random.normal(k1b, (k, Cout, Cout), dtype=jnp.float32)
        w2a = 0.1 * jax.random.normal(k2a, (k, Cin, Cout), dtype=jnp.float32)
        w2b = 0.1 * jax.random.normal(k2b, (k, Cout, Cout), dtype=jnp.float32)

        out = jax.block_until_ready(gcn_forward(x, w1a, w1b, w2a, w2b, k))
        ref = gcn_reference(x, w1a, w1b, w2a, w2b, k)
        assert out.shape == (N, Cout, H, W)
        err = jnp.max(jnp.abs(out - ref))
        # bf16 MXU operands with f32 accumulation -> loosened tolerance.
        assert jnp.allclose(out, ref, rtol=4e-2, atol=4e-2), f"max abs err {err}"

    run_case(2, 4, 4, 16, 16, 7)   # B=1, grid=(2,)  (both v7x TCs busy)
    run_case(8, 4, 4, 16, 16, 7)   # B=4, grid=(2,)  (batched lane-concat path)

    print("KERNEL_OK")
</pallas_src>

<mosaic_0001>
module attributes {stable_mosaic.version = 11 : i64} {
  func.func @gcn_kernel(%arg0: i32, %arg1: memref<1x8x256xf32, #tpu.memory_space<vmem>>, %arg2: memref<8x112xbf16, #tpu.memory_space<vmem>>, %arg3: memref<4x112xbf16, #tpu.memory_space<vmem>>, %arg4: memref<1x4x256xf32, #tpu.memory_space<vmem>>, %arg5: memref<8x512xf32, #tpu.memory_space<vmem>>, %arg6: memref<112x256xf32, #tpu.memory_space<vmem>>) attributes {dimension_semantics = [#tpu.dimension_semantics<parallel>], iteration_bounds = array<i64: 2>, scalar_prefetch = 0 : i64, scratch_operands = 2 : i64, tpu.core_type = #tpu.core_type<tc>, window_params = [{transform_indices = @transform_0, window_bounds = array<i64: 1, 8, 256>}, {pipeline_mode = #tpu.pipeline_mode<synchronous>, transform_indices = @transform_1, window_bounds = array<i64: 8, 112>}, {pipeline_mode = #tpu.pipeline_mode<synchronous>, transform_indices = @transform_2, window_bounds = array<i64: 4, 112>}, {transform_indices = @transform_3, window_bounds = array<i64: 1, 4, 256>}]} {
    %cst = arith.constant 0.000000e+00 : f32
    %0 = vector.broadcast %cst : f32 to vector<8x48xf32>
    %c0 = arith.constant 0 : index
    %c80 = arith.constant 80 : index
    %1 = vector.load %arg5[%c0, %c80] : memref<8x512xf32, #tpu.memory_space<vmem>>, vector<8x48xf32>
    tpu.vector_store %arg5[%c0, %c80], %0 {strides = array<i32>} : memref<8x512xf32, #tpu.memory_space<vmem>>, vector<8x48xf32>,
    %cst_0 = arith.constant 0.000000e+00 : f32
    %2 = vector.broadcast %cst_0 : f32 to vector<8x48xf32>
    %c0_1 = arith.constant 0 : index
    %c384 = arith.constant 384 : index
    %3 = vector.load %arg5[%c0_1, %c384] : memref<8x512xf32, #tpu.memory_space<vmem>>, vector<8x48xf32>
    tpu.vector_store %arg5[%c0_1, %c384], %2 {strides = array<i32>} : memref<8x512xf32, #tpu.memory_space<vmem>>, vector<8x48xf32>,
    %4 = tpu.iota {dimensions = array<i32: 1>} : vector<1x256xi32>
    %c15_i32 = arith.constant 15 : i32
    %5 = vector.broadcast %c15_i32 : i32 to vector<1x256xi32>
    %6 = arith.andi %4, %5 : vector<1x256xi32>
    %c0_2 = arith.constant 0 : index
    %c0_3 = arith.constant 0 : index
    %c0_4 = arith.constant 0 : index
    %7 = vector.load %arg1[%c0_2, %c0_3, %c0_4] : memref<1x8x256xf32, #tpu.memory_space<vmem>>, vector<1x8x256xf32>
    %8 = vector.shape_cast %7 : vector<1x8x256xf32> to vector<8x256xf32>
    %c0_5 = arith.constant 0 : index
    %c128 = arith.constant 128 : index
    %9 = vector.load %arg5[%c0_5, %c128] : memref<8x512xf32, #tpu.memory_space<vmem>>, vector<8x256xf32>
    tpu.vector_store %arg5[%c0_5, %c128], %8 {strides = array<i32>} : memref<8x512xf32, #tpu.memory_space<vmem>>, vector<8x256xf32>,
    %c0_6 = arith.constant 0 : index
    %c0_7 = arith.constant 0 : index
    %10 = vector.load %arg2[%c0_6, %c0_7] : memref<8x112xbf16, #tpu.memory_space<vmem>>, vector<8x112xbf16>
    %c0_8 = arith.constant 0 : index
    %c80_9 = arith.constant 80 : index
    %11 = vector.load %arg5[%c0_8, %c80_9] : memref<8x512xf32, #tpu.memory_space<vmem>>, vector<8x256xf32>
    %c0_10 = arith.constant 0 : index
    %c0_11 = arith.constant 0 : index
    %12 = vector.load %arg6[%c0_10, %c0_11] : memref<112x256xf32, #tpu.memory_space<vmem>>, vector<8x256xf32>
    tpu.vector_store %arg6[%c0_10, %c0_11], %11 {strides = array<i32>} : memref<112x256xf32, #tpu.memory_space<vmem>>, vector<8x256xf32>,
    %c0_12 = arith.constant 0 : index
    %c96 = arith.constant 96 : index
    %13 = vector.load %arg5[%c0_12, %c96] : memref<8x512xf32, #tpu.memory_space<vmem>>, vector<8x256xf32>
    %c8 = arith.constant 8 : index
    %c0_13 = arith.constant 0 : index
    %14 = vector.load %arg6[%c8, %c0_13] : memref<112x256xf32, #tpu.memory_space<vmem>>, vector<8x256xf32>
    tpu.vector_store %arg6[%c8, %c0_13], %13 {strides = array<i32>} : memref<112x256xf32, #tpu.memory_space<vmem>>, vector<8x256xf32>,
    %c0_14 = arith.constant 0 : index
    %c112 = arith.constant 112 : index
    %15 = vector.load %arg5[%c0_14, %c112] : memref<8x512xf32, #tpu.memory_space<vmem>>, vector<8x256xf32>
    %c16 = arith.constant 16 : index
    %c0_15 = arith.constant 0 : index
    %16 = vector.load %arg6[%c16, %c0_15] : memref<112x256xf32, #tpu.memory_space<vmem>>, vector<8x256xf32>
    tpu.vector_store %arg6[%c16, %c0_15], %15 {strides = array<i32>} : memref<112x256xf32, #tpu.memory_space<vmem>>, vector<8x256xf32>,
    %c0_16 = arith.constant 0 : index
    %c128_17 = arith.constant 128 : index
    %17 = vector.load %arg5[%c0_16, %c128_17] : memref<8x512xf32, #tpu.memory_space<vmem>>, vector<8x256xf32>
    %c24 = arith.constant 24 : index
    %c0_18 = arith.constant 0 : index
    %18 = vector.load %arg6[%c24, %c0_18] : memref<112x256xf32, #tpu.memory_space<vmem>>, vector<8x256xf32>
    tpu.vector_store %arg6[%c24, %c0_18], %17 {strides = array<i32>} : memref<112x256xf32, #tpu.memory_space<vmem>>, vector<8x256xf32>,
    %c0_19 = arith.constant 0 : index
    %c144 = arith.constant 144 : index
    %19 = vector.load %arg5[%c0_19, %c144] : memref<8x512xf32, #tpu.memory_space<vmem>>, vector<8x256xf32>
    %c32 = arith.constant 32 : index
    %c0_20 = arith.constant 0 : index
    %20 = vector.load %arg6[%c32, %c0_20] : memref<112x256xf32, #tpu.memory_space<vmem>>, vector<8x256xf32>
    tpu.vector_store %arg6[%c32, %c0_20], %19 {strides = array<i32>} : memref<112x256xf32, #tpu.memory_space<vmem>>, vector<8x256xf32>,
    %c0_21 = arith.constant 0 : index
    %c160 = arith.constant 160 : index
    %21 = vector.load %arg5[%c0_21, %c160] : memref<8x512xf32, #tpu.memory_space<vmem>>, vector<8x256xf32>
    %c40 = arith.constant 40 : index
    %c0_22 = arith.constant 0 : index
    %22 = vector.load %arg6[%c40, %c0_22] : memref<112x256xf32, #tpu.memory_space<vmem>>, vector<8x256xf32>
    tpu.vector_store %arg6[%c40, %c0_22], %21 {strides = array<i32>} : memref<112x256xf32, #tpu.memory_space<vmem>>, vector<8x256xf32>,
    %c0_23 = arith.constant 0 : index
    %c176 = arith.constant 176 : index
    %23 = vector.load %arg5[%c0_23, %c176] : memref<8x512xf32, #tpu.memory_space<vmem>>, vector<8x256xf32>
    %c48 = arith.constant 48 : index
    %c0_24 = arith.constant 0 : index
    %24 = vector.load %arg6[%c48, %c0_24] : memref<112x256xf32, #tpu.memory_space<vmem>>, vector<8x256xf32>
    tpu.vector_store %arg6[%c48, %c0_24], %23 {strides = array<i32>} : memref<112x256xf32, #tpu.memory_space<vmem>>, vector<8x256xf32>,
    %c-3_i32 = arith.constant -3 : i32
    %25 = vector.broadcast %c-3_i32 : i32 to vector<1x256xi32>
    %26 = arith.addi %6, %25 : vector<1x256xi32>
    %c0_i32 = arith.constant 0 : i32
    %27 = vector.broadcast %c0_i32 : i32 to vector<1x256xi32>
    %28 = arith.cmpi sge, %26, %27 : vector<1x256xi32>
    %c-3_i32_25 = arith.constant -3 : i32
    %29 = vector.broadcast %c-3_i32_25 : i32 to vector<1x256xi32>
    %30 = arith.addi %6, %29 : vector<1x256xi32>
    %c16_i32 = arith.constant 16 : i32
    %31 = vector.broadcast %c16_i32 : i32 to vector<1x256xi32>
    %32 = arith.cmpi slt, %30, %31 : vector<1x256xi32>
    %33 = arith.andi %28, %32 : vector<1x256xi1>
    %34 = arith.extui %33 : vector<1x256xi1> to vector<1x256xi32>
    %35 = arith.sitofp %34 : vector<1x256xi32> to vector<1x256xf32>
    %c0_26 = arith.constant 0 : index
    %c125 = arith.constant 125 : index
    %36 = vector.load %arg5[%c0_26, %c125] : memref<8x512xf32, #tpu.memory_space<vmem>>, vector<8x256xf32>
    %37 = vector.broadcast %35 : vector<1x256xf32> to vector<8x256xf32>
    %38 = arith.mulf %36, %37 : vector<8x256xf32>
    %c56 = arith.constant 56 : index
    %c0_27 = arith.constant 0 : index
    %39 = vector.load %arg6[%c56, %c0_27] : memref<112x256xf32, #tpu.memory_space<vmem>>, vector<8x256xf32>
    tpu.vector_store %arg6[%c56, %c0_27], %38 {strides = array<i32>} : memref<112x256xf32, #tpu.memory_space<vmem>>, vector<8x256xf32>,
    %c-2_i32 = arith.constant -2 : i32
    %40 = vector.broadcast %c-2_i32 : i32 to vector<1x256xi32>
    %41 = arith.addi %6, %40 : vector<1x256xi32>
    %c0_i32_28 = arith.constant 0 : i32
    %42 = vector.broadcast %c0_i32_28 : i32 to vector<1x256xi32>
    %43 = arith.cmpi sge, %41, %42 : vector<1x256xi32>
    %c-2_i32_29 = arith.constant -2 : i32
    %44 = vector.broadcast %c-2_i32_29 : i32 to vector<1x256xi32>
    %45 = arith.addi %6, %44 : vector<1x256xi32>
    %c16_i32_30 = arith.constant 16 : i32
    %46 = vector.broadcast %c16_i32_30 : i32 to vector<1x256xi32>
    %47 = arith.cmpi slt, %45, %46 : vector<1x256xi32>
    %48 = arith.andi %43, %47 : vector<1x256xi1>
    %49 = arith.extui %48 : vector<1x256xi1> to vector<1x256xi32>
    %50 = arith.sitofp %49 : vector<1x256xi32> to vector<1x256xf32>
    %c0_31 = arith.constant 0 : index
    %c126 = arith.constant 126 : index
    %51 = vector.load %arg5[%c0_31, %c126] : memref<8x512xf32, #tpu.memory_space<vmem>>, vector<8x256xf32>
    %52 = vector.broadcast %50 : vector<1x256xf32> to vector<8x256xf32>
    %53 = arith.mulf %51, %52 : vector<8x256xf32>
    %c64 = arith.constant 64 : index
    %c0_32 = arith.constant 0 : index
    %54 = vector.load %arg6[%c64, %c0_32] : memref<112x256xf32, #tpu.memory_space<vmem>>, vector<8x256xf32>
    tpu.vector_store %arg6[%c64, %c0_32], %53 {strides = array<i32>} : memref<112x256xf32, #tpu.memory_space<vmem>>, vector<8x256xf32>,
    %c-1_i32 = arith.constant -1 : i32
    %55 = vector.broadcast %c-1_i32 : i32 to vector<1x256xi32>
    %56 = arith.addi %6, %55 : vector<1x256xi32>
    %c0_i32_33 = arith.constant 0 : i32
    %57 = vector.broadcast %c0_i32_33 : i32 to vector<1x256xi32>
    %58 = arith.cmpi sge, %56, %57 : vector<1x256xi32>
    %c-1_i32_34 = arith.constant -1 : i32
    %59 = vector.broadcast %c-1_i32_34 : i32 to vector<1x256xi32>
    %60 = arith.addi %6, %59 : vector<1x256xi32>
    %c16_i32_35 = arith.constant 16 : i32
    %61 = vector.broadcast %c16_i32_35 : i32 to vector<1x256xi32>
    %62 = arith.cmpi slt, %60, %61 : vector<1x256xi32>
    %63 = arith.andi %58, %62 : vector<1x256xi1>
    %64 = arith.extui %63 : vector<1x256xi1> to vector<1x256xi32>
    %65 = arith.sitofp %64 : vector<1x256xi32> to vector<1x256xf32>
    %c0_36 = arith.constant 0 : index
    %c127 = arith.constant 127 : index
    %66 = vector.load %arg5[%c0_36, %c127] : memref<8x512xf32, #tpu.memory_space<vmem>>, vector<8x256xf32>
    %67 = vector.broadcast %65 : vector<1x256xf32> to vector<8x256xf32>
    %68 = arith.mulf %66, %67 : vector<8x256xf32>
    %c72 = arith.constant 72 : index
    %c0_37 = arith.constant 0 : index
    %69 = vector.load %arg6[%c72, %c0_37] : memref<112x256xf32, #tpu.memory_space<vmem>>, vector<8x256xf32>
    tpu.vector_store %arg6[%c72, %c0_37], %68 {strides = array<i32>} : memref<112x256xf32, #tpu.memory_space<vmem>>, vector<8x256xf32>,
    %c0_38 = arith.constant 0 : index
    %c128_39 = arith.constant 128 : index
    %70 = vector.load %arg5[%c0_38, %c128_39] : memref<8x512xf32, #tpu.memory_space<vmem>>, vector<8x256xf32>
    %c80_40 = arith.constant 80 : index
    %c0_41 = arith.constant 0 : index
    %71 = vector.load %arg6[%c80_40, %c0_41] : memref<112x256xf32, #tpu.memory_space<vmem>>, vector<8x256xf32>
    tpu.vector_store %arg6[%c80_40, %c0_41], %70 {strides = array<i32>} : memref<112x256xf32, #tpu.memory_space<vmem>>, vector<8x256xf32>,
    %c1_i32 = arith.constant 1 : i32
    %72 = vector.broadcast %c1_i32 : i32 to vector<1x256xi32>
    %73 = arith.addi %6, %72 : vector<1x256xi32>
    %c0_i32_42 = arith.constant 0 : i32
    %74 = vector.broadcast %c0_i32_42 : i32 to vector<1x256xi32>
    %75 = arith.cmpi sge, %73, %74 : vector<1x256xi32>
    %c1_i32_43 = arith.constant 1 : i32
    %76 = vector.broadcast %c1_i32_43 : i32 to vector<1x256xi32>
    %77 = arith.addi %6, %76 : vector<1x256xi32>
    %c16_i32_44 = arith.constant 16 : i32
    %78 = vector.broadcast %c16_i32_44 : i32 to vector<1x256xi32>
    %79 = arith.cmpi slt, %77, %78 : vector<1x256xi32>
    %80 = arith.andi %75, %79 : vector<1x256xi1>
    %81 = arith.extui %80 : vector<1x256xi1> to vector<1x256xi32>
    %82 = arith.sitofp %81 : vector<1x256xi32> to vector<1x256xf32>
    %c0_45 = arith.constant 0 : index
    %c129 = arith.constant 129 : index
    %83 = vector.load %arg5[%c0_45, %c129] : memref<8x512xf32, #tpu.memory_space<vmem>>, vector<8x256xf32>
    %84 = vector.broadcast %82 : vector<1x256xf32> to vector<8x256xf32>
    %85 = arith.mulf %83, %84 : vector<8x256xf32>
    %c88 = arith.constant 88 : index
    %c0_46 = arith.constant 0 : index
    %86 = vector.load %arg6[%c88, %c0_46] : memref<112x256xf32, #tpu.memory_space<vmem>>, vector<8x256xf32>
    tpu.vector_store %arg6[%c88, %c0_46], %85 {strides = array<i32>} : memref<112x256xf32, #tpu.memory_space<vmem>>, vector<8x256xf32>,
    %c2_i32 = arith.constant 2 : i32
    %87 = vector.broadcast %c2_i32 : i32 to vector<1x256xi32>
    %88 = arith.addi %6, %87 : vector<1x256xi32>
    %c0_i32_47 = arith.constant 0 : i32
    %89 = vector.broadcast %c0_i32_47 : i32 to vector<1x256xi32>
    %90 = arith.cmpi sge, %88, %89 : vector<1x256xi32>
    %c2_i32_48 = arith.constant 2 : i32
    %91 = vector.broadcast %c2_i32_48 : i32 to vector<1x256xi32>
    %92 = arith.addi %6, %91 : vector<1x256xi32>
    %c16_i32_49 = arith.constant 16 : i32
    %93 = vector.broadcast %c16_i32_49 : i32 to vector<1x256xi32>
    %94 = arith.cmpi slt, %92, %93 : vector<1x256xi32>
    %95 = arith.andi %90, %94 : vector<1x256xi1>
    %96 = arith.extui %95 : vector<1x256xi1> to vector<1x256xi32>
    %97 = arith.sitofp %96 : vector<1x256xi32> to vector<1x256xf32>
    %c0_50 = arith.constant 0 : index
    %c130 = arith.constant 130 : index
    %98 = vector.load %arg5[%c0_50, %c130] : memref<8x512xf32, #tpu.memory_space<vmem>>, vector<8x256xf32>
    %99 = vector.broadcast %97 : vector<1x256xf32> to vector<8x256xf32>
    %100 = arith.mulf %98, %99 : vector<8x256xf32>
    %c96_51 = arith.constant 96 : index
    %c0_52 = arith.constant 0 : index
    %101 = vector.load %arg6[%c96_51, %c0_52] : memref<112x256xf32, #tpu.memory_space<vmem>>, vector<8x256xf32>
    tpu.vector_store %arg6[%c96_51, %c0_52], %100 {strides = array<i32>} : memref<112x256xf32, #tpu.memory_space<vmem>>, vector<8x256xf32>,
    %c3_i32 = arith.constant 3 : i32
    %102 = vector.broadcast %c3_i32 : i32 to vector<1x256xi32>
    %103 = arith.addi %6, %102 : vector<1x256xi32>
    %c0_i32_53 = arith.constant 0 : i32
    %104 = vector.broadcast %c0_i32_53 : i32 to vector<1x256xi32>
    %105 = arith.cmpi sge, %103, %104 : vector<1x256xi32>
    %c3_i32_54 = arith.constant 3 : i32
    %106 = vector.broadcast %c3_i32_54 : i32 to vector<1x256xi32>
    %107 = arith.addi %6, %106 : vector<1x256xi32>
    %c16_i32_55 = arith.constant 16 : i32
    %108 = vector.broadcast %c16_i32_55 : i32 to vector<1x256xi32>
    %109 = arith.cmpi slt, %107, %108 : vector<1x256xi32>
    %110 = arith.andi %105, %109 : vector<1x256xi1>
    %111 = arith.extui %110 : vector<1x256xi1> to vector<1x256xi32>
    %112 = arith.sitofp %111 : vector<1x256xi32> to vector<1x256xf32>
    %c0_56 = arith.constant 0 : index
    %c131 = arith.constant 131 : index
    %113 = vector.load %arg5[%c0_56, %c131] : memref<8x512xf32, #tpu.memory_space<vmem>>, vector<8x256xf32>
    %114 = vector.broadcast %112 : vector<1x256xf32> to vector<8x256xf32>
    %115 = arith.mulf %113, %114 : vector<8x256xf32>
    %c104 = arith.constant 104 : index
    %c0_57 = arith.constant 0 : index
    %116 = vector.load %arg6[%c104, %c0_57] : memref<112x256xf32, #tpu.memory_space<vmem>>, vector<8x256xf32>
    tpu.vector_store %arg6[%c104, %c0_57], %115 {strides = array<i32>} : memref<112x256xf32, #tpu.memory_space<vmem>>, vector<8x256xf32>,
    %c0_58 = arith.constant 0 : index
    %c0_59 = arith.constant 0 : index
    %117 = vector.load %arg6[%c0_58, %c0_59] : memref<112x256xf32, #tpu.memory_space<vmem>>, vector<112x256xf32>
    %118 = arith.truncf %117 : vector<112x256xf32> to vector<112x256xbf16>
    %cst_60 = arith.constant dense<0.000000e+00> : vector<8x256xf32>
    %119 = tpu.matmul %10, %118, %cst_60 {dimension_numbers = #tpu.dot_dimension_numbers<[1], [0], [0], [1], [0, 0, 1, 1], [], []>} : vector<8x112xbf16>, vector<112x256xbf16>, vector<8x256xf32> -> vector<8x256xf32>
    %c0_61 = arith.constant 0 : index
    %c128_62 = arith.constant 128 : index
    %120 = vector.load %arg5[%c0_61, %c128_62] : memref<8x512xf32, #tpu.memory_space<vmem>>, vector<8x256xf32>
    tpu.vector_store %arg5[%c0_61, %c128_62], %119 {strides = array<i32>} : memref<8x512xf32, #tpu.memory_space<vmem>>, vector<8x256xf32>,
    %c0_63 = arith.constant 0 : index
    %c0_64 = arith.constant 0 : index
    %121 = vector.load %arg3[%c0_63, %c0_64] : memref<4x112xbf16, #tpu.memory_space<vmem>>, vector<4x112xbf16>
    %c0_65 = arith.constant 0 : index
    %c80_66 = arith.constant 80 : index
    %122 = vector.load %arg5[%c0_65, %c80_66] : memref<8x512xf32, #tpu.memory_space<vmem>>, vector<8x256xf32>
    %c0_67 = arith.constant 0 : index
    %c0_68 = arith.constant 0 : index
    %123 = vector.load %arg6[%c0_67, %c0_68] : memref<112x256xf32, #tpu.memory_space<vmem>>, vector<8x256xf32>
    tpu.vector_store %arg6[%c0_67, %c0_68], %122 {strides = array<i32>} : memref<112x256xf32, #tpu.memory_space<vmem>>, vector<8x256xf32>,
    %c0_69 = arith.constant 0 : index
    %c96_70 = arith.constant 96 : index
    %124 = vector.load %arg5[%c0_69, %c96_70] : memref<8x512xf32, #tpu.memory_space<vmem>>, vector<8x256xf32>
    %c8_71 = arith.constant 8 : index
    %c0_72 = arith.constant 0 : index
    %125 = vector.load %arg6[%c8_71, %c0_72] : memref<112x256xf32, #tpu.memory_space<vmem>>, vector<8x256xf32>
    tpu.vector_store %arg6[%c8_71, %c0_72], %124 {strides = array<i32>} : memref<112x256xf32, #tpu.memory_space<vmem>>, vector<8x256xf32>,
    %c0_73 = arith.constant 0 : index
    %c112_74 = arith.constant 112 : index
    %126 = vector.load %arg5[%c0_73, %c112_74] : memref<8x512xf32, #tpu.memory_space<vmem>>, vector<8x256xf32>
    %c16_75 = arith.constant 16 : index
    %c0_76 = arith.constant 0 : index
    %127 = vector.load %arg6[%c16_75, %c0_76] : memref<112x256xf32, #tpu.memory_space<vmem>>, vector<8x256xf32>
    tpu.vector_store %arg6[%c16_75, %c0_76], %126 {strides = array<i32>} : memref<112x256xf32, #tpu.memory_space<vmem>>, vector<8x256xf32>,
    %c0_77 = arith.constant 0 : index
    %c128_78 = arith.constant 128 : index
    %128 = vector.load %arg5[%c0_77, %c128_78] : memref<8x512xf32, #tpu.memory_space<vmem>>, vector<8x256xf32>
    %c24_79 = arith.constant 24 : index
    %c0_80 = arith.constant 0 : index
    %129 = vector.load %arg6[%c24_79, %c0_80] : memref<112x256xf32, #tpu.memory_space<vmem>>, vector<8x256xf32>
    tpu.vector_store %arg6[%c24_79, %c0_80], %128 {strides = array<i32>} : memref<112x256xf32, #tpu.memory_space<vmem>>, vector<8x256xf32>,
    %c0_81 = arith.constant 0 : index
    %c144_82 = arith.constant 144 : index
    %130 = vector.load %arg5[%c0_81, %c144_82] : memref<8x512xf32, #tpu.memory_space<vmem>>, vector<8x256xf32>
    %c32_83 = arith.constant 32 : index
    %c0_84 = arith.constant 0 : index
    %131 = vector.load %arg6[%c32_83, %c0_84] : memref<112x256xf32, #tpu.memory_space<vmem>>, vector<8x256xf32>
    tpu.vector_store %arg6[%c32_83, %c0_84], %130 {strides = array<i32>} : memref<112x256xf32, #tpu.memory_space<vmem>>, vector<8x256xf32>,
    %c0_85 = arith.constant 0 : index
    %c160_86 = arith.constant 160 : index
    %132 = vector.load %arg5[%c0_85, %c160_86] : memref<8x512xf32, #tpu.memory_space<vmem>>, vector<8x256xf32>
    %c40_87 = arith.constant 40 : index
    %c0_88 = arith.constant 0 : index
    %133 = vector.load %arg6[%c40_87, %c0_88] : memref<112x256xf32, #tpu.memory_space<vmem>>, vector<8x256xf32>
    tpu.vector_store %arg6[%c40_87, %c0_88], %132 {strides = array<i32>} : memref<112x256xf32, #tpu.memory_space<vmem>>, vector<8x256xf32>,
    %c0_89 = arith.constant 0 : index
    %c176_90 = arith.constant 176 : index
    %134 = vector.load %arg5[%c0_89, %c176_90] : memref<8x512xf32, #tpu.memory_space<vmem>>, vector<8x256xf32>
    %c48_91 = arith.constant 48 : index
    %c0_92 = arith.constant 0 : index
    %135 = vector.load %arg6[%c48_91, %c0_92] : memref<112x256xf32, #tpu.memory_space<vmem>>, vector<8x256xf32>
    tpu.vector_store %arg6[%c48_91, %c0_92], %134 {strides = array<i32>} : memref<112x256xf32, #tpu.memory_space<vmem>>, vector<8x256xf32>,
    %c-3_i32_93 = arith.constant -3 : i32
    %136 = vector.broadcast %c-3_i32_93 : i32 to vector<1x256xi32>
    %137 = arith.addi %6, %136 : vector<1x256xi32>
    %c0_i32_94 = arith.constant 0 : i32
    %138 = vector.broadcast %c0_i32_94 : i32 to vector<1x256xi32>
    %139 = arith.cmpi sge, %137, %138 : vector<1x256xi32>
    %c-3_i32_95 = arith.constant -3 : i32
    %140 = vector.broadcast %c-3_i32_95 : i32 to vector<1x256xi32>
    %141 = arith.addi %6, %140 : vector<1x256xi32>
    %c16_i32_96 = arith.constant 16 : i32
    %142 = vector.broadcast %c16_i32_96 : i32 to vector<1x256xi32>
    %143 = arith.cmpi slt, %141, %142 : vector<1x256xi32>
    %144 = arith.andi %139, %143 : vector<1x256xi1>
    %145 = arith.extui %144 : vector<1x256xi1> to vector<1x256xi32>
    %146 = arith.sitofp %145 : vector<1x256xi32> to vector<1x256xf32>
    %c0_97 = arith.constant 0 : index
    %c125_98 = arith.constant 125 : index
    %147 = vector.load %arg5[%c0_97, %c125_98] : memref<8x512xf32, #tpu.memory_space<vmem>>, vector<8x256xf32>
    %148 = vector.broadcast %146 : vector<1x256xf32> to vector<8x256xf32>
    %149 = arith.mulf %147, %148 : vector<8x256xf32>
    %c56_99 = arith.constant 56 : index
    %c0_100 = arith.constant 0 : index
    %150 = vector.load %arg6[%c56_99, %c0_100] : memref<112x256xf32, #tpu.memory_space<vmem>>, vector<8x256xf32>
    tpu.vector_store %arg6[%c56_99, %c0_100], %149 {strides = array<i32>} : memref<112x256xf32, #tpu.memory_space<vmem>>, vector<8x256xf32>,
    %c-2_i32_101 = arith.constant -2 : i32
    %151 = vector.broadcast %c-2_i32_101 : i32 to vector<1x256xi32>
    %152 = arith.addi %6, %151 : vector<1x256xi32>
    %c0_i32_102 = arith.constant 0 : i32
    %153 = vector.broadcast %c0_i32_102 : i32 to vector<1x256xi32>
    %154 = arith.cmpi sge, %152, %153 : vector<1x256xi32>
    %c-2_i32_103 = arith.constant -2 : i32
    %155 = vector.broadcast %c-2_i32_103 : i32 to vector<1x256xi32>
    %156 = arith.addi %6, %155 : vector<1x256xi32>
    %c16_i32_104 = arith.constant 16 : i32
    %157 = vector.broadcast %c16_i32_104 : i32 to vector<1x256xi32>
    %158 = arith.cmpi slt, %156, %157 : vector<1x256xi32>
    %159 = arith.andi %154, %158 : vector<1x256xi1>
    %160 = arith.extui %159 : vector<1x256xi1> to vector<1x256xi32>
    %161 = arith.sitofp %160 : vector<1x256xi32> to vector<1x256xf32>
    %c0_105 = arith.constant 0 : index
    %c126_106 = arith.constant 126 : index
    %162 = vector.load %arg5[%c0_105, %c126_106] : memref<8x512xf32, #tpu.memory_space<vmem>>, vector<8x256xf32>
    %163 = vector.broadcast %161 : vector<1x256xf32> to vector<8x256xf32>
    %164 = arith.mulf %162, %163 : vector<8x256xf32>
    %c64_107 = arith.constant 64 : index
    %c0_108 = arith.constant 0 : index
    %165 = vector.load %arg6[%c64_107, %c0_108] : memref<112x256xf32, #tpu.memory_space<vmem>>, vector<8x256xf32>
    tpu.vector_store %arg6[%c64_107, %c0_108], %164 {strides = array<i32>} : memref<112x256xf32, #tpu.memory_space<vmem>>, vector<8x256xf32>,
    %c-1_i32_109 = arith.constant -1 : i32
    %166 = vector.broadcast %c-1_i32_109 : i32 to vector<1x256xi32>
    %167 = arith.addi %6, %166 : vector<1x256xi32>
    %c0_i32_110 = arith.constant 0 : i32
    %168 = vector.broadcast %c0_i32_110 : i32 to vector<1x256xi32>
    %169 = arith.cmpi sge, %167, %168 : vector<1x256xi32>
    %c-1_i32_111 = arith.constant -1 : i32
    %170 = vector.broadcast %c-1_i32_111 : i32 to vector<1x256xi32>
    %171 = arith.addi %6, %170 : vector<1x256xi32>
    %c16_i32_112 = arith.constant 16 : i32
    %172 = vector.broadcast %c16_i32_112 : i32 to vector<1x256xi32>
    %173 = arith.cmpi slt, %171, %172 : vector<1x256xi32>
    %174 = arith.andi %169, %173 : vector<1x256xi1>
    %175 = arith.extui %174 : vector<1x256xi1> to vector<1x256xi32>
    %176 = arith.sitofp %175 : vector<1x256xi32> to vector<1x256xf32>
    %c0_113 = arith.constant 0 : index
    %c127_114 = arith.constant 127 : index
    %177 = vector.load %arg5[%c0_113, %c127_114] : memref<8x512xf32, #tpu.memory_space<vmem>>, vector<8x256xf32>
    %178 = vector.broadcast %176 : vector<1x256xf32> to vector<8x256xf32>
    %179 = arith.mulf %177, %178 : vector<8x256xf32>
    %c72_115 = arith.constant 72 : index
    %c0_116 = arith.constant 0 : index
    %180 = vector.load %arg6[%c72_115, %c0_116] : memref<112x256xf32, #tpu.memory_space<vmem>>, vector<8x256xf32>
    tpu.vector_store %arg6[%c72_115, %c0_116], %179 {strides = array<i32>} : memref<112x256xf32, #tpu.memory_space<vmem>>, vector<8x256xf32>,
    %c0_117 = arith.constant 0 : index
    %c128_118 = arith.constant 128 : index
    %181 = vector.load %arg5[%c0_117, %c128_118] : memref<8x512xf32, #tpu.memory_space<vmem>>, vector<8x256xf32>
    %c80_119 = arith.constant 80 : index
    %c0_120 = arith.constant 0 : index
    %182 = vector.load %arg6[%c80_119, %c0_120] : memref<112x256xf32, #tpu.memory_space<vmem>>, vector<8x256xf32>
    tpu.vector_store %arg6[%c80_119, %c0_120], %181 {strides = array<i32>} : memref<112x256xf32, #tpu.memory_space<vmem>>, vector<8x256xf32>,
    %c1_i32_121 = arith.constant 1 : i32
    %183 = vector.broadcast %c1_i32_121 : i32 to vector<1x256xi32>
    %184 = arith.addi %6, %183 : vector<1x256xi32>
    %c0_i32_122 = arith.constant 0 : i32
    %185 = vector.broadcast %c0_i32_122 : i32 to vector<1x256xi32>
    %186 = arith.cmpi sge, %184, %185 : vector<1x256xi32>
    %c1_i32_123 = arith.constant 1 : i32
    %187 = vector.broadcast %c1_i32_123 : i32 to vector<1x256xi32>
    %188 = arith.addi %6, %187 : vector<1x256xi32>
    %c16_i32_124 = arith.constant 16 : i32
    %189 = vector.broadcast %c16_i32_124 : i32 to vector<1x256xi32>
    %190 = arith.cmpi slt, %188, %189 : vector<1x256xi32>
    %191 = arith.andi %186, %190 : vector<1x256xi1>
    %192 = arith.extui %191 : vector<1x256xi1> to vector<1x256xi32>
    %193 = arith.sitofp %192 : vector<1x256xi32> to vector<1x256xf32>
    %c0_125 = arith.constant 0 : index
    %c129_126 = arith.constant 129 : index
    %194 = vector.load %arg5[%c0_125, %c129_126] : memref<8x512xf32, #tpu.memory_space<vmem>>, vector<8x256xf32>
    %195 = vector.broadcast %193 : vector<1x256xf32> to vector<8x256xf32>
    %196 = arith.mulf %194, %195 : vector<8x256xf32>
    %c88_127 = arith.constant 88 : index
    %c0_128 = arith.constant 0 : index
    %197 = vector.load %arg6[%c88_127, %c0_128] : memref<112x256xf32, #tpu.memory_space<vmem>>, vector<8x256xf32>
    tpu.vector_store %arg6[%c88_127, %c0_128], %196 {strides = array<i32>} : memref<112x256xf32, #tpu.memory_space<vmem>>, vector<8x256xf32>,
    %c2_i32_129 = arith.constant 2 : i32
    %198 = vector.broadcast %c2_i32_129 : i32 to vector<1x256xi32>
    %199 = arith.addi %6, %198 : vector<1x256xi32>
    %c0_i32_130 = arith.constant 0 : i32
    %200 = vector.broadcast %c0_i32_130 : i32 to vector<1x256xi32>
    %201 = arith.cmpi sge, %199, %200 : vector<1x256xi32>
    %c2_i32_131 = arith.constant 2 : i32
    %202 = vector.broadcast %c2_i32_131 : i32 to vector<1x256xi32>
    %203 = arith.addi %6, %202 : vector<1x256xi32>
    %c16_i32_132 = arith.constant 16 : i32
    %204 = vector.broadcast %c16_i32_132 : i32 to vector<1x256xi32>
    %205 = arith.cmpi slt, %203, %204 : vector<1x256xi32>
    %206 = arith.andi %201, %205 : vector<1x256xi1>
    %207 = arith.extui %206 : vector<1x256xi1> to vector<1x256xi32>
    %208 = arith.sitofp %207 : vector<1x256xi32> to vector<1x256xf32>
    %c0_133 = arith.constant 0 : index
    %c130_134 = arith.constant 130 : index
    %209 = vector.load %arg5[%c0_133, %c130_134] : memref<8x512xf32, #tpu.memory_space<vmem>>, vector<8x256xf32>
    %210 = vector.broadcast %208 : vector<1x256xf32> to vector<8x256xf32>
    %211 = arith.mulf %209, %210 : vector<8x256xf32>
    %c96_135 = arith.constant 96 : index
    %c0_136 = arith.constant 0 : index
    %212 = vector.load %arg6[%c96_135, %c0_136] : memref<112x256xf32, #tpu.memory_space<vmem>>, vector<8x256xf32>
    tpu.vector_store %arg6[%c96_135, %c0_136], %211 {strides = array<i32>} : memref<112x256xf32, #tpu.memory_space<vmem>>, vector<8x256xf32>,
    %c3_i32_137 = arith.constant 3 : i32
    %213 = vector.broadcast %c3_i32_137 : i32 to vector<1x256xi32>
    %214 = arith.addi %6, %213 : vector<1x256xi32>
    %c0_i32_138 = arith.constant 0 : i32
    %215 = vector.broadcast %c0_i32_138 : i32 to vector<1x256xi32>
    %216 = arith.cmpi sge, %214, %215 : vector<1x256xi32>
    %c3_i32_139 = arith.constant 3 : i32
    %217 = vector.broadcast %c3_i32_139 : i32 to vector<1x256xi32>
    %218 = arith.addi %6, %217 : vector<1x256xi32>
    %c16_i32_140 = arith.constant 16 : i32
    %219 = vector.broadcast %c16_i32_140 : i32 to vector<1x256xi32>
    %220 = arith.cmpi slt, %218, %219 : vector<1x256xi32>
    %221 = arith.andi %216, %220 : vector<1x256xi1>
    %222 = arith.extui %221 : vector<1x256xi1> to vector<1x256xi32>
    %223 = arith.sitofp %222 : vector<1x256xi32> to vector<1x256xf32>
    %c0_141 = arith.constant 0 : index
    %c131_142 = arith.constant 131 : index
    %224 = vector.load %arg5[%c0_141, %c131_142] : memref<8x512xf32, #tpu.memory_space<vmem>>, vector<8x256xf32>
    %225 = vector.broadcast %223 : vector<1x256xf32> to vector<8x256xf32>
    %226 = arith.mulf %224, %225 : vector<8x256xf32>
    %c104_143 = arith.constant 104 : index
    %c0_144 = arith.constant 0 : index
    %227 = vector.load %arg6[%c104_143, %c0_144] : memref<112x256xf32, #tpu.memory_space<vmem>>, vector<8x256xf32>
    tpu.vector_store %arg6[%c104_143, %c0_144], %226 {strides = array<i32>} : memref<112x256xf32, #tpu.memory_space<vmem>>, vector<8x256xf32>,
    %c0_145 = arith.constant 0 : index
    %c0_146 = arith.constant 0 : index
    %228 = vector.load %arg6[%c0_145, %c0_146] : memref<112x256xf32, #tpu.memory_space<vmem>>, vector<112x256xf32>
    %229 = arith.truncf %228 : vector<112x256xf32> to vector<112x256xbf16>
    %cst_147 = arith.constant dense<0.000000e+00> : vector<4x256xf32>
    %230 = tpu.matmul %121, %229, %cst_147 {dimension_numbers = #tpu.dot_dimension_numbers<[1], [0], [0], [1], [0, 0, 1, 1], [], []>} : vector<4x112xbf16>, vector<112x256xbf16>, vector<4x256xf32> -> vector<4x256xf32>
    %c0_148 = arith.constant 0 : index
    %c0_149 = arith.constant 0 : index
    %c0_150 = arith.constant 0 : index
    %231 = vector.load %arg4[%c0_148, %c0_149, %c0_150] : memref<1x4x256xf32, #tpu.memory_space<vmem>>, vector<1x4x256xf32>
    %232 = vector.shape_cast %231 : vector<1x4x256xf32> to vector<4x256xf32>
    %233 = vector.shape_cast %230 : vector<4x256xf32> to vector<1x4x256xf32>
    tpu.vector_store %arg4[%c0_148, %c0_149, %c0_150], %233 {strides = array<i32>} : memref<1x4x256xf32, #tpu.memory_space<vmem>>, vector<1x4x256xf32>,
    return
  }
  func.func @transform_0(%arg0: i32) -> (i32, i32, i32) {
    %c0_i32 = arith.constant 0 : i32
    %c0_i32_0 = arith.constant 0 : i32
    %c0_i32_1 = arith.constant 0 : i32
    return %arg0, %c0_i32, %c0_i32_0 : i32, i32, i32
  }
  func.func @transform_1(%arg0: i32) -> (i32, i32) {
    %c0_i32 = arith.constant 0 : i32
    %c0_i32_0 = arith.constant 0 : i32
    %c0_i32_1 = arith.constant 0 : i32
    return %c0_i32, %c0_i32_0 : i32, i32
  }
  func.func @transform_2(%arg0: i32) -> (i32, i32) {
    %c0_i32 = arith.constant 0 : i32
    %c0_i32_0 = arith.constant 0 : i32
    %c0_i32_1 = arith.constant 0 : i32
    return %c0_i32, %c0_i32_0 : i32, i32
  }
  func.func @transform_3(%arg0: i32) -> (i32, i32, i32) {
    %c0_i32 = arith.constant 0 : i32
    %c0_i32_0 = arith.constant 0 : i32
    %c0_i32_1 = arith.constant 0 : i32
    return %arg0, %c0_i32, %c0_i32_0 : i32, i32, i32
  }
}

</mosaic_0001>

<llo_original>
// kernel: tpu_custom_call.1
$region0: #{tpu_custom_call.1}
  #allocation0 [shape = 'u32[]', space=smem, size = 0x4, offset = 0x4, fixed_abs, tag = 'smem constant byte address 0x4 - core index']
  #allocation1 [shape = 'u32[144,128]{1,0:T(1,128)}', space=vmem, size = 0x12000, scoped, tag = 'internal scratch']
  #allocation2 [shape = 'f32[8,512]{1,0:T(8,128)}', space=vmem, size = 0x4000, scoped, tag = 'scratch operand']
  #allocation3 [shape = 'f32[112,256]{1,0:T(8,128)}', space=vmem, size = 0x1c000, scoped, tag = 'scratch operand']
  %s0 = inlined_call_operand.hbm [shape: f32[2,8,256], index: 0, kind: input, shape index: {}]
  %s1 = inlined_call_operand.hbm [shape: bf16[8,112], index: 1, kind: input, shape index: {}]
  %s2 = inlined_call_operand.vmem [shape: bf16[4,112], index: 2, kind: input, shape index: {}]
  %s3 = inlined_call_operand.hbm [shape: f32[2,4,256], index: 3, kind: output, shape index: {}]
  %s4 = sld [smem:[#allocation0]]
  $region53: #{tpu_custom_call.1} parent=0
    _
  %s6 = ssub.s32 1, %s4
  %s7 = scalar_select 0, %s6, %s4
  $region1: #{tpu_custom_call.1} parent=0
    #allocation4 [shape = 'u8[16384]{0}', space=vmem, size = 0x4000, scoped, tag = 'input window, operand 0']
    #allocation5 [shape = 's32[2]{0}', space=sflag, size = 0x8, scoped, tag = 'scoped memory for tpu_custom_call.1']
    #allocation6 [shape = 's32[2]{0}', space=sflag, size = 0x8, scoped, tag = 'scoped memory for tpu_custom_call.1']
    #allocation7 [shape = 'u8[2048]{0}', space=vmem, size = 0x800, scoped, tag = 'input window, operand 1, single buffered']
    #allocation8 [shape = 's32[1]{0}', space=sflag, size = 0x4, scoped, tag = 'scoped memory for tpu_custom_call.1']
    #allocation9 [shape = 'u8[8192]{0}', space=vmem, size = 0x2000, scoped, tag = 'output window, operand 0']
    %8 = vsyncpa [#allocation5], 0
    %s9 = scalar_lea.sflag [#allocation5], 1
    %10 = vsyncpa %s9, 0
    %11 = vsyncpa [#allocation8], 0
    %12 = vsyncpa [#allocation6], 0
    %s13 = scalar_lea.sflag [#allocation6], 1
    %14 = vsyncpa %s13, 0
    loop: start=0, step=1, limit=4
    $region2: #{tpu_custom_call.1} parent=1 // loop_pre_header
      _
    $region3: #{tpu_custom_call.1} parent=1 // loop_header
      %s16 = sphi 0, %s20
      %p17 = scmp.ge.s32.totalorder %s16, 4
      %s26 = sphi 0, %s28
      %s29 = sphi 0, %s26
      %s30 = sphi 0, %s29
      %s46 = sphi 0, %s30
      %s50 = sphi 0, %s50
      %s52 = sphi 0, %s50
      %s53 = sphi 0, %s52
      %s67 = sphi 0, %s53
      %s71 = sphi 0, %s71
      %s73 = sphi 0, %s71
      %s74 = sphi 0, %s73
      %s88 = sphi 0, %s74
      %s94 = sphi 0, %s96
      %s97 = sphi 0, %s94
      %s98 = sphi 0, %s97
      %s114 = sphi 0, %s98
    $region4: #{tpu_custom_call.1} parent=1 // loop_header_branch
      %19 = sbr.rel (%p17) target = $region8
    $region5: #{tpu_custom_call.1} parent=1 // loop_body
      %s21 = ssub.s32 %s16, 1
      %s22 = ssub.s32 %s16, 2
      %s23 = sadd.s32 %s16, 1
      %s24 = ssub.s32 %s16, %s23
      %p25 = scmp.eq.s32.totalorder %s24, 0
      %s27 = sadd.s32 %s26, 1
      %s28 = scalar_select %p25, %s26, %s27
      %p31 = pneg %p25
      %p32 = scmp.eq.s32.totalorder %s16, 1
      %p33 = por %p31, %p32
      %p34 = scmp.ne.s32.totalorder %s26, %s29
      %p35 = scmp.eq.s32.totalorder %s16, 0
      %p36 = por %p34, %p35
      %p37 = scmp.ne.s32.totalorder %s26, %s29
      %p38 = scmp.eq.s32.totalorder %s21, 1
      %p39 = por %p37, %p38
      %p40 = scmp.ne.s32.totalorder %s29, %s30
      %p41 = scmp.eq.s32.totalorder %s21, 0
      %p42 = por %p40, %p41
      %p43 = scmp.ne.s32.totalorder %s29, %s30
      %p44 = scmp.eq.s32.totalorder %s22, 1
      %p45 = por %p43, %p44
      %p47 = scmp.ne.s32.totalorder %s30, %s46
      %p48 = scmp.eq.s32.totalorder %s22, 0
      %p49 = por %p47, %p48
      %s51 = sadd.s32 %s50, 1
      %p54 = scmp.eq.s32.totalorder %s16, 1
      %p55 = scmp.ne.s32.totalorder %s50, %s52
      %p56 = scmp.eq.s32.totalorder %s16, 0
      %p57 = por %p55, %p56
      %p58 = scmp.ne.s32.totalorder %s50, %s52
      %p59 = scmp.eq.s32.totalorder %s21, 1
      %p60 = por %p58, %p59
      %p61 = scmp.ne.s32.totalorder %s52, %s53
      %p62 = scmp.eq.s32.totalorder %s21, 0
      %p63 = por %p61, %p62
      %p64 = scmp.ne.s32.totalorder %s52, %s53
      %p65 = scmp.eq.s32.totalorder %s22, 1
      %p66 = por %p64, %p65
      %p68 = scmp.ne.s32.totalorder %s53, %s67
      %p69 = scmp.eq.s32.totalorder %s22, 0
      %p70 = por %p68, %p69
      %s72 = sadd.s32 %s71, 1
      %p75 = scmp.eq.s32.totalorder %s16, 1
      %p76 = scmp.ne.s32.totalorder %s71, %s73
      %p77 = scmp.eq.s32.totalorder %s16, 0
      %p78 = por %p76, %p77
      %p79 = scmp.ne.s32.totalorder %s71, %s73
      %p80 = scmp.eq.s32.totalorder %s21, 1
      %p81 = por %p79, %p80
      %p82 = scmp.ne.s32.totalorder %s73, %s74
      %p83 = scmp.eq.s32.totalorder %s21, 0
      %p84 = por %p82, %p83
      %p85 = scmp.ne.s32.totalorder %s73, %s74
      %p86 = scmp.eq.s32.totalorder %s22, 1
      %p87 = por %p85, %p86
      %p89 = scmp.ne.s32.totalorder %s74, %s88
      %p90 = scmp.eq.s32.totalorder %s22, 0
      %p91 = por %p89, %p90
      %s92 = ssub.s32 %s16, %s23
      %p93 = scmp.eq.s32.totalorder %s92, 0
      %s95 = sadd.s32 %s94, 1
      %s96 = scalar_select %p93, %s94, %s95
      %p99 = pneg %p93
      %p100 = scmp.eq.s32.totalorder %s16, 1
      %p101 = por %p99, %p100
      %p102 = scmp.ne.s32.totalorder %s94, %s97
      %p103 = scmp.eq.s32.totalorder %s16, 0
      %p104 = por %p102, %p103
      %p105 = scmp.ne.s32.totalorder %s94, %s97
      %p106 = scmp.eq.s32.totalorder %s21, 1
      %p107 = por %p105, %p106
      %p108 = scmp.ne.s32.totalorder %s97, %s98
      %p109 = scmp.eq.s32.totalorder %s21, 0
      %p110 = por %p108, %p109
      %p111 = scmp.ne.s32.totalorder %s97, %s98
      %p112 = scmp.eq.s32.totalorder %s22, 1
      %p113 = por %p111, %p112
      %p115 = scmp.ne.s32.totalorder %s98, %s114
      %p116 = scmp.eq.s32.totalorder %s22, 0
      %p117 = por %p115, %p116
      %p118 = scmp.le.s32.totalorder 1, %s16
      %p119 = scmp.lt.s32.totalorder %s16, 3
      %p120 = pnand %p118, %p119
      %p121 = pneg %p120
      // Predicated region
      $region9: #{tpu_custom_call.1} parent=5 // pred_check
        _
      $region10: #{tpu_custom_call.1} parent=5 // pred_check_branch
        %123 = sbr.rel (%p120) target = $region12
      $region11: #{tpu_custom_call.1} parent=5 // pred_region
        %s124 = ssub.s32 %s16, 1
        // Predicated region
        $region13: #{tpu_custom_call.1} parent=11 // pred_check
          %p125 = pneg %p63
        $region14: #{tpu_custom_call.1} parent=11 // pred_check_branch
          %127 = sbr.rel (%p125) target = $region16
        $region15: #{tpu_custom_call.1} parent=11 // pred_region
          %s129 = ssub.s32 64, 64
          %130 = vsyncadd [#allocation8], %s129
          %s132 = sshll.u32 [#allocation7], 4
          %s133 = int_to_ptr.vmem [resolvable:$true] %s132
          %135 = dma.hbm_to_vmem [thread:$0]  %s1, 64, %s133, [#allocation8]
        $region16: #{tpu_custom_call.1} parent=11 // pred_fallthru
          _
        // Predicated region
        $region17: #{tpu_custom_call.1} parent=11 // pred_check
          %p136 = pneg %p84
        $region18: #{tpu_custom_call.1} parent=11 // pred_check_branch
          %138 = sbr.rel (%p136) target = $region20
        $region19: #{tpu_custom_call.1} parent=11 // pred_region
          _
        $region20: #{tpu_custom_call.1} parent=11 // pred_fallthru
          _
      $region12: #{tpu_custom_call.1} parent=5 // pred_fallthru
        _
      %p139 = scmp.lt.s32.totalorder %s16, 2
      // Predicated region
      $region21: #{tpu_custom_call.1} parent=5 // pred_check
        %p140 = pneg %p139
      $region22: #{tpu_custom_call.1} parent=5 // pred_check_branch
        %142 = sbr.rel (%p140) target = $region24
      $region23: #{tpu_custom_call.1} parent=5 // pred_region
        // Predicated region
        $region25: #{tpu_custom_call.1} parent=23 // pred_check
          %p143 = pneg %p36
        $region26: #{tpu_custom_call.1} parent=23 // pred_check_branch
          %145 = sbr.rel (%p143) target = $region28
        $region27: #{tpu_custom_call.1} parent=23 // pred_region
          %s146 = sand.u32 %s26, 1
          %s147 = scalar_lea.sflag [#allocation5], %s146
          %s148 = sand.u32 %s26, 1
          %s149 = smul.addr %s148, 16
          %s150 = scalar_lea.vmem [#allocation4], %s149
          %s152 = ssub.s32 256, 256
          %153 = vsyncadd %s147, %s152
          %s154 = smul.addr %s16, 2
          %s155 = smul.addr %s154, 128
          %s156 = scalar_lea.hbm %s0, %s155
          %s158 = sshll.u32 %s150, 4
          %s159 = int_to_ptr.vmem [resolvable:$true] %s158
          %161 = dma.hbm_to_vmem [thread:$0]  %s156, 256, %s159, %s147
        $region28: #{tpu_custom_call.1} parent=23 // pred_fallthru
          _
      $region24: #{tpu_custom_call.1} parent=5 // pred_fallthru
        _
      %p162 = scmp.le.s32.totalorder 1, %s16
      %p163 = scmp.lt.s32.totalorder %s16, 3
      %p164 = pnand %p162, %p163
      %p165 = pneg %p164
      // Predicated region
      $region29: #{tpu_custom_call.1} parent=5 // pred_check
        _
      $region30: #{tpu_custom_call.1} parent=5 // pred_check_branch
        %167 = sbr.rel (%p164) target = $region32
      $region31: #{tpu_custom_call.1} parent=5 // pred_region
        %s168 = ssub.s32 %s16, 1
        %s169 = sand.u32 %s29, 1
        %s170 = scalar_lea.sflag [#allocation5], %s169
        %s171 = sand.u32 %s29, 1
        %s172 = smul.addr %s171, 16
        %s173 = scalar_lea.vmem [#allocation4], %s172
        // Predicated region
        $region33: #{tpu_custom_call.1} parent=31 // pred_check
          %p174 = pneg %p42
        $region34: #{tpu_custom_call.1} parent=31 // pred_check_branch
          %176 = sbr.rel (%p174) target = $region36
        $region35: #{tpu_custom_call.1} parent=31 // pred_region
          %177 = dma.done %s170, 256
        $region36: #{tpu_custom_call.1} parent=31 // pred_fallthru
          _
        // Predicated region
        $region37: #{tpu_custom_call.1} parent=31 // pred_check
          %p178 = pneg %p63
        $region38: #{tpu_custom_call.1} parent=31 // pred_check_branch
          %180 = sbr.rel (%p178) target = $region40
        $region39: #{tpu_custom_call.1} parent=31 // pred_region
          %181 = dma.done [#allocation8], 64
        $region40: #{tpu_custom_call.1} parent=31 // pred_fallthru
          _
        %s182 = sand.u32 %s29, 1
        %s183 = scalar_lea.sflag [#allocation5], %s182
        %s184 = sand.u32 %s29, 1
        %s185 = smul.addr %s184, 16
        %s186 = scalar_lea.vmem [#allocation4], %s185
        %p187 = pneg %p42
        %p188 = pneg %p39
        %p189 = pneg %p63
        %p190 = pneg %p60
        %p191 = pneg %p84
        %p192 = pneg %p81
        %p193 = pneg %p110
        %p194 = pneg %p107
        %s195 = sand.u32 %s97, 1
        %s196 = scalar_lea.sflag [#allocation6], %s195
        %s197 = sand.u32 %s97, 1
        %s198 = smul.addr %s197, 8
        %s199 = scalar_lea.vmem [#allocation9], %s198
        %vm201 = vcmask 1048192
        %202 = vst.msk [vmem:[#allocation2] sm:$0xff] %vm201, 0.0
        %vm203 = vcmask 392192
        %204 = vst.msk [vmem:[#allocation2 + $0x18] sm:$0xff] %vm203, 0.0
        %v205 = vlaneseq
        %v206 = vand.u32 %v205, 127
        %v207 = vadd.s32 %v206, 128
        %v208 = vand.u32 %v206, 15
        %v209 = vand.u32 %v207, 15
        %v210 = vld [vmem:[%s173] sm:$0xff]
        %v211 = vld [vmem:[%s173 + $0x8] sm:$0xff]
        %212 = vst [vmem:[#allocation2 + $0x8] sm:$0xff] %v210
        %213 = vst [vmem:[#allocation2 + $0x10] sm:$0xff] %v211
        %v214 = vld [vmem:[#allocation7] sm:$0xf]
        %v215 = vld [vmem:[#allocation2] sm:$0xff]
        %v216 = vld [vmem:[#allocation2 + $0x8] sm:$0xff]
        %v217 = vld [vmem:[#allocation2 + $0x10] sm:$0xff]
        %221 = vrot.lane.b32.xlu0 %v215, 48
        %v222 = vpop.permute.xlu0 %221
        %223 = vrot.lane.b32.xlu0 %v216, 48
        %v224 = vpop.permute.xlu0 %223
        %225 = vrot.lane.b32.xlu0 %v217, 48
        %v226 = vpop.permute.xlu0 %225
        %v227 = vsel %vm203, %v222, %v224
        %v228 = vsel %vm203, %v224, %v226
        %231 = vst [vmem:[#allocation3] sm:$0xff] %v227
        %232 = vst [vmem:[#allocation3 + $0x8] sm:$0xff] %v228
        %v233 = vld [vmem:[#allocation2] sm:$0xff]
        %v234 = vld [vmem:[#allocation2 + $0x8] sm:$0xff]
        %v235 = vld [vmem:[#allocation2 + $0x10] sm:$0xff]
        %239 = vrot.lane.b32.xlu0 %v233, 32
        %v240 = vpop.permute.xlu0 %239
        %241 = vrot.lane.b32.xlu0 %v234, 32
        %v242 = vpop.permute.xlu0 %241
        %243 = vrot.lane.b32.xlu0 %v235, 32
        %v244 = vpop.permute.xlu0 %243
        %vm245 = vcmask 261120
        %v246 = vsel %vm245, %v240, %v242
        %v247 = vsel %vm245, %v242, %v244
        %250 = vst [vmem:[#allocation3 + $0x10] sm:$0xff] %v246
        %251 = vst [vmem:[#allocation3 + $0x18] sm:$0xff] %v247
        %v252 = vld [vmem:[#allocation2] sm:$0xff]
        %v253 = vld [vmem:[#allocation2 + $0x8] sm:$0xff]
        %v254 = vld [vmem:[#allocation2 + $0x10] sm:$0xff]
        %258 = vrot.lane.b32.xlu0 %v252, 16
        %v259 = vpop.permute.xlu0 %258
        %260 = vrot.lane.b32.xlu0 %v253, 16
        %v261 = vpop.permute.xlu0 %260
        %262 = vrot.lane.b32.xlu0 %v254, 16
        %v263 = vpop.permute.xlu0 %262
        %vm264 = vcmask 130048
        %v265 = vsel %vm264, %v259, %v261
        %v266 = vsel %vm264, %v261, %v263
        %269 = vst [vmem:[#allocation3 + $0x20] sm:$0xff] %v265
        %270 = vst [vmem:[#allocation3 + $0x28] sm:$0xff] %v266
        %v271 = vld [vmem:[#allocation2 + $0x8] sm:$0xff]
        %v272 = vld [vmem:[#allocation2 + $0x10] sm:$0xff]
        %273 = vst [vmem:[#allocation3 + $0x30] sm:$0xff] %v271
        %274 = vst [vmem:[#allocation3 + $0x38] sm:$0xff] %v272
        %v275 = vld [vmem:[#allocation2 + $0x8] sm:$0xff]
        %v276 = vld [vmem:[#allocation2 + $0x10] sm:$0xff]
        %v277 = vld [vmem:[#allocation2 + $0x18] sm:$0xff]
        %281 = vrot.lane.b32.xlu0 %v275, 112
        %v282 = vpop.permute.xlu0 %281
        %283 = vrot.lane.b32.xlu0 %v276, 112
        %v284 = vpop.permute.xlu0 %283
        %285 = vrot.lane.b32.xlu0 %v277, 112
        %v286 = vpop.permute.xlu0 %285
        %vm287 = vcmask 916480
        %v288 = vsel %vm287, %v282, %v284
        %v289 = vsel %vm287, %v284, %v286
        %292 = vst [vmem:[#allocation3 + $0x40] sm:$0xff] %v288
        %293 = vst [vmem:[#allocation3 + $0x48] sm:$0xff] %v289
        %v294 = vld [vmem:[#allocation2 + $0x8] sm:$0xff]
        %v295 = vld [vmem:[#allocation2 + $0x10] sm:$0xff]
        %v296 = vld [vmem:[#allocation2 + $0x18] sm:$0xff]
        %300 = vrot.lane.b32.xlu0 %v294, 96
        %v301 = vpop.permute.xlu0 %300
        %302 = vrot.lane.b32.xlu0 %v295, 96
        %v303 = vpop.permute.xlu0 %302
        %304 = vrot.lane.b32.xlu0 %v296, 96
        %v305 = vpop.permute.xlu0 %304
        %vm306 = vcmask 785408
        %v307 = vsel %vm306, %v301, %v303
        %v308 = vsel %vm306, %v303, %v305
        %311 = vst [vmem:[#allocation3 + $0x50] sm:$0xff] %v307
        %312 = vst [vmem:[#allocation3 + $0x58] sm:$0xff] %v308
        %v313 = vld [vmem:[#allocation2 + $0x8] sm:$0xff]
        %v314 = vld [vmem:[#allocation2 + $0x10] sm:$0xff]
        %v315 = vld [vmem:[#allocation2 + $0x18] sm:$0xff]
        %319 = vrot.lane.b32.xlu0 %v313, 80
        %v320 = vpop.permute.xlu0 %319
        %321 = vrot.lane.b32.xlu0 %v314, 80
        %v322 = vpop.permute.xlu0 %321
        %323 = vrot.lane.b32.xlu0 %v315, 80
        %v324 = vpop.permute.xlu0 %323
        %vm325 = vcmask 654336
        %v326 = vsel %vm325, %v320, %v322
        %v327 = vsel %vm325, %v322, %v324
        %330 = vst [vmem:[#allocation3 + $0x60] sm:$0xff] %v326
        %331 = vst [vmem:[#allocation3 + $0x68] sm:$0xff] %v327
        %v332 = vadd.s32 %v208, 4294967293
        %v333 = vadd.s32 %v209, 4294967293
        %vm334 = vcmp.ge.s32.totalorder %v332, 0
        %vm335 = vcmp.ge.s32.totalorder %v333, 0
        %vm336 = vcmp.lt.s32.totalorder %v332, 16
        %vm337 = vcmp.lt.s32.totalorder %v333, 16
        %vm338 = vmand %vm334, %vm336
        %vm339 = vmand %vm335, %vm337
        %v340 = vsel %vm338, 1, 0
        %v341 = vsel %vm339, 1, 0
        %v342 = vcvt.s32.f32 %v340
        %v343 = vcvt.s32.f32 %v341
        %v344 = vld [vmem:[#allocation2] sm:$0xff]
        %v345 = vld [vmem:[#allocation2 + $0x8] sm:$0xff]
        %v346 = vld [vmem:[#allocation2 + $0x10] sm:$0xff]
        %349 = vrot.lane.b32.xlu0 %v342, 125
        %v350 = vpop.permute.xlu0 %349
        %351 = vrot.lane.b32.xlu0 %v343, 125
        %v352 = vpop.permute.xlu0 %351
        %vm353 = vcmask 1022976
        %v354 = vsel %vm353, %v350, %v352
        %v358 = vmul.f32 %v344, %v350
        %v359 = vmul.f32 %v345, %v354
        %v360 = vmul.f32 %v346, %v352
        %364 = vrot.lane.b32.xlu0 %v358, 3
        %v365 = vpop.permute.xlu0 %364
        %366 = vrot.lane.b32.xlu0 %v359, 3
        %v367 = vpop.permute.xlu0 %366
        %368 = vrot.lane.b32.xlu0 %v360, 3
        %v369 = vpop.permute.xlu0 %368
        %vm370 = vcmask 23552
        %v371 = vsel %vm370, %v365, %v367
        %v372 = vsel %vm370, %v367, %v369
        %375 = vst [vmem:[#allocation3 + $0x70] sm:$0xff] %v371
        %376 = vst [vmem:[#allocation3 + $0x78] sm:$0xff] %v372
        %v377 = vadd.s32 %v208, 4294967294
        %v378 = vadd.s32 %v209, 4294967294
        %vm379 = vcmp.ge.s32.totalorder %v377, 0
        %vm380 = vcmp.ge.s32.totalorder %v378, 0
        %vm381 = vcmp.lt.s32.totalorder %v377, 16
        %vm382 = vcmp.lt.s32.totalorder %v378, 16
        %vm383 = vmand %vm379, %vm381
        %vm384 = vmand %vm380, %vm382
        %v385 = vsel %vm383, 1, 0
        %v386 = vsel %vm384, 1, 0
        %v387 = vcvt.s32.f32 %v385
        %v388 = vcvt.s32.f32 %v386
        %v389 = vld [vmem:[#allocation2] sm:$0xff]
        %v390 = vld [vmem:[#allocation2 + $0x8] sm:$0xff]
        %v391 = vld [vmem:[#allocation2 + $0x10] sm:$0xff]
        %394 = vrot.lane.b32.xlu0 %v387, 126
        %v395 = vpop.permute.xlu0 %394
        %396 = vrot.lane.b32.xlu0 %v388, 126
        %v397 = vpop.permute.xlu0 %396
        %vm398 = vcmask 1031168
        %v399 = vsel %vm398, %v395, %v397
        %v403 = vmul.f32 %v389, %v395
        %v404 = vmul.f32 %v390, %v399
        %v405 = vmul.f32 %v391, %v397
        %409 = vrot.lane.b32.xlu0 %v403, 2
        %v410 = vpop.permute.xlu0 %409
        %411 = vrot.lane.b32.xlu0 %v404, 2
        %v412 = vpop.permute.xlu0 %411
        %413 = vrot.lane.b32.xlu0 %v405, 2
        %v414 = vpop.permute.xlu0 %413
        %vm415 = vcmask 15360
        %v416 = vsel %vm415, %v410, %v412
        %v417 = vsel %vm415, %v412, %v414
        %420 = vst [vmem:[#allocation3 + $0x80] sm:$0xff] %v416
        %421 = vst [vmem:[#allocation3 + $0x88] sm:$0xff] %v417
        %v422 = vadd.s32 %v208, 4294967295
        %v423 = vadd.s32 %v209, 4294967295
        %vm424 = vcmp.ge.s32.totalorder %v422, 0
        %vm425 = vcmp.ge.s32.totalorder %v423, 0
        %vm426 = vcmp.lt.s32.totalorder %v422, 16
        %vm427 = vcmp.lt.s32.totalorder %v423, 16
        %vm428 = vmand %vm424, %vm426
        %vm429 = vmand %vm425, %vm427
        %v430 = vsel %vm428, 1, 0
        %v431 = vsel %vm429, 1, 0
        %v432 = vcvt.s32.f32 %v430
        %v433 = vcvt.s32.f32 %v431
        %v434 = vld [vmem:[#allocation2] sm:$0xff]
        %v435 = vld [vmem:[#allocation2 + $0x8] sm:$0xff]
        %v436 = vld [vmem:[#allocation2 + $0x10] sm:$0xff]
        %439 = vrot.lane.b32.xlu0 %v432, 127
        %v440 = vpop.permute.xlu0 %439
        %441 = vrot.lane.b32.xlu0 %v433, 127
        %v442 = vpop.permute.xlu0 %441
        %vm443 = vcmask 1039360
        %v444 = vsel %vm443, %v440, %v442
        %v448 = vmul.f32 %v434, %v440
        %v449 = vmul.f32 %v435, %v444
        %v450 = vmul.f32 %v436, %v442
        %454 = vrot.lane.b32.xlu0 %v448, 1
        %v455 = vpop.permute.xlu0 %454
        %456 = vrot.lane.b32.xlu0 %v449, 1
        %v457 = vpop.permute.xlu0 %456
        %458 = vrot.lane.b32.xlu0 %v450, 1
        %v459 = vpop.permute.xlu0 %458
        %vm460 = vcmask 7168
        %v461 = vsel %vm460, %v455, %v457
        %v462 = vsel %vm460, %v457, %v459
        %465 = vst [vmem:[#allocation3 + $0x90] sm:$0xff] %v461
        %466 = vst [vmem:[#allocation3 + $0x98] sm:$0xff] %v462
        %v467 = vld [vmem:[#allocation2 + $0x8] sm:$0xff]
        %v468 = vld [vmem:[#allocation2 + $0x10] sm:$0xff]
        %469 = vst [vmem:[#allocation3 + $0xa0] sm:$0xff] %v467
        %470 = vst [vmem:[#allocation3 + $0xa8] sm:$0xff] %v468
        %v471 = vadd.s32 %v208, 1
        %v472 = vadd.s32 %v209, 1
        %vm473 = vcmp.ge.s32.totalorder %v471, 0
        %vm474 = vcmp.ge.s32.totalorder %v472, 0
        %vm475 = vcmp.lt.s32.totalorder %v471, 16
        %vm476 = vcmp.lt.s32.totalorder %v472, 16
        %vm477 = vmand %vm473, %vm475
        %vm478 = vmand %vm474, %vm476
        %v479 = vsel %vm477, 1, 0
        %v480 = vsel %vm478, 1, 0
        %v481 = vcvt.s32.f32 %v479
        %v482 = vcvt.s32.f32 %v480
        %v483 = vld [vmem:[#allocation2 + $0x8] sm:$0xff]
        %v484 = vld [vmem:[#allocation2 + $0x10] sm:$0xff]
        %v485 = vld [vmem:[#allocation2 + $0x18] sm:$0xff]
        %488 = vrot.lane.b32.xlu0 %v481, 1
        %v489 = vpop.permute.xlu0 %488
        %490 = vrot.lane.b32.xlu0 %v482, 1
        %v491 = vpop.permute.xlu0 %490
        %v492 = vsel %vm460, %v489, %v491
        %v496 = vmul.f32 %v483, %v489
        %v497 = vmul.f32 %v484, %v492
        %v498 = vmul.f32 %v485, %v491
        %502 = vrot.lane.b32.xlu0 %v496, 127
        %v503 = vpop.permute.xlu0 %502
        %504 = vrot.lane.b32.xlu0 %v497, 127
        %v505 = vpop.permute.xlu0 %504
        %506 = vrot.lane.b32.xlu0 %v498, 127
        %v507 = vpop.permute.xlu0 %506
        %v508 = vsel %vm443, %v503, %v505
        %v509 = vsel %vm443, %v505, %v507
        %512 = vst [vmem:[#allocation3 + $0xb0] sm:$0xff] %v508
        %513 = vst [vmem:[#allocation3 + $0xb8] sm:$0xff] %v509
        %v514 = vadd.s32 %v208, 2
        %v515 = vadd.s32 %v209, 2
        %vm516 = vcmp.ge.s32.totalorder %v514, 0
        %vm517 = vcmp.ge.s32.totalorder %v515, 0
        %vm518 = vcmp.lt.s32.totalorder %v514, 16
        %vm519 = vcmp.lt.s32.totalorder %v515, 16
        %vm520 = vmand %vm516, %vm518
        %vm521 = vmand %vm517, %vm519
        %v522 = vsel %vm520, 1, 0
        %v523 = vsel %vm521, 1, 0
        %v524 = vcvt.s32.f32 %v522
        %v525 = vcvt.s32.f32 %v523
        %v526 = vld [vmem:[#allocation2 + $0x8] sm:$0xff]
        %v527 = vld [vmem:[#allocation2 + $0x10] sm:$0xff]
        %v528 = vld [vmem:[#allocation2 + $0x18] sm:$0xff]
        %531 = vrot.lane.b32.xlu0 %v524, 2
        %v532 = vpop.permute.xlu0 %531
        %533 = vrot.lane.b32.xlu0 %v525, 2
        %v534 = vpop.permute.xlu0 %533
        %v535 = vsel %vm415, %v532, %v534
        %v539 = vmul.f32 %v526, %v532
        %v540 = vmul.f32 %v527, %v535
        %v541 = vmul.f32 %v528, %v534
        %545 = vrot.lane.b32.xlu0 %v539, 126
        %v546 = vpop.permute.xlu0 %545
        %547 = vrot.lane.b32.xlu0 %v540, 126
        %v548 = vpop.permute.xlu0 %547
        %549 = vrot.lane.b32.xlu0 %v541, 126
        %v550 = vpop.permute.xlu0 %549
        %v551 = vsel %vm398, %v546, %v548
        %v552 = vsel %vm398, %v548, %v550
        %555 = vst [vmem:[#allocation3 + $0xc0] sm:$0xff] %v551
        %556 = vst [vmem:[#allocation3 + $0xc8] sm:$0xff] %v552
        %v557 = vadd.s32 %v208, 3
        %v558 = vadd.s32 %v209, 3
        %vm559 = vcmp.ge.s32.totalorder %v557, 0
        %vm560 = vcmp.ge.s32.totalorder %v558, 0
        %vm561 = vcmp.lt.s32.totalorder %v557, 16
        %vm562 = vcmp.lt.s32.totalorder %v558, 16
        %vm563 = vmand %vm559, %vm561
        %vm564 = vmand %vm560, %vm562
        %v565 = vsel %vm563, 1, 0
        %v566 = vsel %vm564, 1, 0
        %v567 = vcvt.s32.f32 %v565
        %v568 = vcvt.s32.f32 %v566
        %v569 = vld [vmem:[#allocation2 + $0x8] sm:$0xff]
        %v570 = vld [vmem:[#allocation2 + $0x10] sm:$0xff]
        %v571 = vld [vmem:[#allocation2 + $0x18] sm:$0xff]
        %574 = vrot.lane.b32.xlu0 %v567, 3
        %v575 = vpop.permute.xlu0 %574
        %576 = vrot.lane.b32.xlu0 %v568, 3
        %v577 = vpop.permute.xlu0 %576
        %v578 = vsel %vm370, %v575, %v577
        %v582 = vmul.f32 %v569, %v575
        %v583 = vmul.f32 %v570, %v578
        %v584 = vmul.f32 %v571, %v577
        %588 = vrot.lane.b32.xlu0 %v582, 125
        %v589 = vpop.permute.xlu0 %588
        %590 = vrot.lane.b32.xlu0 %v583, 125
        %v591 = vpop.permute.xlu0 %590
        %592 = vrot.lane.b32.xlu0 %v584, 125
        %v593 = vpop.permute.xlu0 %592
        %v594 = vsel %vm353, %v589, %v591
        %v595 = vsel %vm353, %v591, %v593
        %598 = vst [vmem:[#allocation3 + $0xd0] sm:$0xff] %v594
        %599 = vst [vmem:[#allocation3 + $0xd8] sm:$0xff] %v595
        %v600 = vld [vmem:[#allocation3] sm:$0xff]
        %v601 = vld [vmem:[#allocation3 + $0x8] sm:$0xff]
        %v602 = vld [vmem:[#allocation3 + $0x10] sm:$0xff]
        %v603 = vld [vmem:[#allocation3 + $0x18] sm:$0xff]
        %v604 = vld [vmem:[#allocation3 + $0x20] sm:$0xff]
        %v605 = vld [vmem:[#allocation3 + $0x28] sm:$0xff]
        %v606 = vld [vmem:[#allocation3 + $0x30] sm:$0xff]
        %v607 = vld [vmem:[#allocation3 + $0x38] sm:$0xff]
        %v608 = vld [vmem:[#allocation3 + $0x40] sm:$0xff]
        %v609 = vld [vmem:[#allocation3 + $0x48] sm:$0xff]
        %v610 = vld [vmem:[#allocation3 + $0x50] sm:$0xff]
        %v611 = vld [vmem:[#allocation3 + $0x58] sm:$0xff]
        %v612 = vld [vmem:[#allocation3 + $0x60] sm:$0xff]
        %v613 = vld [vmem:[#allocation3 + $0x68] sm:$0xff]
        %v614 = vld [vmem:[#allocation3 + $0x70] sm:$0xff]
        %v615 = vld [vmem:[#allocation3 + $0x78] sm:$0xff]
        %v616 = vld [vmem:[#allocation3 + $0x80] sm:$0xff]
        %v617 = vld [vmem:[#allocation3 + $0x88] sm:$0xff]
        %v618 = vld [vmem:[#allocation3 + $0x90] sm:$0xff]
        %v619 = vld [vmem:[#allocation3 + $0x98] sm:$0xff]
        %v620 = vld [vmem:[#allocation3 + $0xa0] sm:$0xff]
        %v621 = vld [vmem:[#allocation3 + $0xa8] sm:$0xff]
        %v622 = vld [vmem:[#allocation3 + $0xb0] sm:$0xff]
        %v623 = vld [vmem:[#allocation3 + $0xb8] sm:$0xff]
        %v624 = vld [vmem:[#allocation3 + $0xc0] sm:$0xff]
        %v625 = vld [vmem:[#allocation3 + $0xc8] sm:$0xff]
        %v626 = vld [vmem:[#allocation3 + $0xd0] sm:$0xff]
        %v627 = vld [vmem:[#allocation3 + $0xd8] sm:$0xff]
        %v628 = vpack.c.bf16 %v602, %v600
        %v629 = vpack.c.bf16 %v603, %v601
        %v630 = vpack.c.bf16 %v606, %v604
        %v631 = vpack.c.bf16 %v607, %v605
        %v632 = vpack.c.bf16 %v610, %v608
        %v633 = vpack.c.bf16 %v611, %v609
        %v634 = vpack.c.bf16 %v614, %v612
        %v635 = vpack.c.bf16 %v615, %v613
        %v636 = vpack.c.bf16 %v618, %v616
        %v637 = vpack.c.bf16 %v619, %v617
        %v638 = vpack.c.bf16 %v622, %v620
        %v639 = vpack.c.bf16 %v623, %v621
        %v640 = vpack.c.bf16 %v626, %v624
        %v641 = vpack.c.bf16 %v627, %v625
        %v643 = vsel %vm287, %v214, 0
        %645 = vmatprep.subr.bf16.mxu0 %v629
        %646 = vmatpush1.bf16.msra.mxu0 %v628
        %647 = vmatprep.subr.bf16.mxu0 %v631
        %648 = vmatpush1.bf16.msra.mxu0 %v630
        %649 = vmatprep.subr.bf16.mxu0 %v633
        %650 = vmatpush1.bf16.msra.mxu0 %v632
        %651 = vmatprep.subr.bf16.mxu0 %v635
        %652 = vmatpush1.bf16.msra.mxu0 %v634
        %653 = vmatprep.subr.bf16.mxu0 %v637
        %654 = vmatpush1.bf16.msra.mxu0 %v636
        %655 = vmatprep.subr.bf16.mxu0 %v639
        %656 = vmatpush1.bf16.msra.mxu0 %v638
        %657 = vmatprep.subr.bf16.mxu0 %v641
        %658 = vmatpush1.bf16.msra.mxu0 %v640
        %659 = vmatprep.subr.bf16.mxu0 0
        %660 = vmatpush1.bf16.msra.mxu0 0
        %661 = vmatprep.subr.bf16.mxu0 0
        %662 = vmatpush1.bf16.msra.mxu0 0
        %663 = vmatprep.subr.bf16.mxu0 0
        %664 = vmatpush1.bf16.msra.mxu0 0
        %665 = vmatprep.subr.bf16.mxu0 0
        %666 = vmatpush1.bf16.msra.mxu0 0
        %667 = vmatprep.subr.bf16.mxu0 0
        %668 = vmatpush1.bf16.msra.mxu0 0
        %669 = vmatprep.subr.bf16.mxu0 0
        %670 = vmatpush1.bf16.msra.mxu0 0
        %671 = vmatprep.subr.bf16.mxu0 0
        %672 = vmatpush1.bf16.msra.mxu0 0
        %673 = vmatprep.subr.bf16.mxu0 0
        %674 = vmatpush1.bf16.msra.mxu0 0
        %675 = vmatprep.subr.bf16.mxu0 0
        %676 = vmatpush1.bf16.msra.mxu0 0
        %677 = vmatprep.mubr.bf16.mxu0 0
        %678 = vmatmul.mubr.bf16.gmra.mrb[0].mxu0 %v643
        %v679 = vpop.f32.mrb[0].mxu0
        %v680 = vadd.f32 0.0, %v679
        %v681 = vpop.f32.mrb[0].mxu0
        %v682 = vadd.f32 0.0, %v681
        %v683 = vpop.f32.mrb[0].mxu0
        %v684 = vpop.f32.mrb[0].mxu0
        %685 = vdwg.mxu0
        %686 = vst [vmem:[#allocation2 + $0x8] sm:$0xff] %v680
        %687 = vst [vmem:[#allocation2 + $0x10] sm:$0xff] %v682
        %v688 = vld [vmem:[%s2] sm:$0x3]
        %v689 = vld [vmem:[#allocation2] sm:$0xff]
        %v690 = vld [vmem:[#allocation2 + $0x8] sm:$0xff]
        %v691 = vld [vmem:[#allocation2 + $0x10] sm:$0xff]
        %695 = vrot.lane.b32.xlu0 %v689, 48
        %v696 = vpop.permute.xlu0 %695
        %697 = vrot.lane.b32.xlu0 %v690, 48
        %v698 = vpop.permute.xlu0 %697
        %699 = vrot.lane.b32.xlu0 %v691, 48
        %v700 = vpop.permute.xlu0 %699
        %v701 = vsel %vm203, %v696, %v698
        %v702 = vsel %vm203, %v698, %v700
        %705 = vst [vmem:[#allocation3] sm:$0xff] %v701
        %706 = vst [vmem:[#allocation3 + $0x8] sm:$0xff] %v702
        %v707 = vld [vmem:[#allocation2] sm:$0xff]
        %v708 = vld [vmem:[#allocation2 + $0x8] sm:$0xff]
        %v709 = vld [vmem:[#allocation2 + $0x10] sm:$0xff]
        %713 = vrot.lane.b32.xlu0 %v707, 32
        %v714 = vpop.permute.xlu0 %713
        %715 = vrot.lane.b32.xlu0 %v708, 32
        %v716 = vpop.permute.xlu0 %715
        %717 = vrot.lane.b32.xlu0 %v709, 32
        %v718 = vpop.permute.xlu0 %717
        %v719 = vsel %vm245, %v714, %v716
        %v720 = vsel %vm245, %v716, %v718
        %723 = vst [vmem:[#allocation3 + $0x10] sm:$0xff] %v719
        %724 = vst [vmem:[#allocation3 + $0x18] sm:$0xff] %v720
        %v725 = vld [vmem:[#allocation2] sm:$0xff]
        %v726 = vld [vmem:[#allocation2 + $0x8] sm:$0xff]
        %v727 = vld [vmem:[#allocation2 + $0x10] sm:$0xff]
        %731 = vrot.lane.b32.xlu0 %v725, 16
        %v732 = vpop.permute.xlu0 %731
        %733 = vrot.lane.b32.xlu0 %v726, 16
        %v734 = vpop.permute.xlu0 %733
        %735 = vrot.lane.b32.xlu0 %v727, 16
        %v736 = vpop.permute.xlu0 %735
        %v737 = vsel %vm264, %v732, %v734
        %v738 = vsel %vm264, %v734, %v736
        %741 = vst [vmem:[#allocation3 + $0x20] sm:$0xff] %v737
        %742 = vst [vmem:[#allocation3 + $0x28] sm:$0xff] %v738
        %v743 = vld [vmem:[#allocation2 + $0x8] sm:$0xff]
        %v744 = vld [vmem:[#allocation2 + $0x10] sm:$0xff]
        %745 = vst [vmem:[#allocation3 + $0x30] sm:$0xff] %v743
        %746 = vst [vmem:[#allocation3 + $0x38] sm:$0xff] %v744
        %v747 = vld [vmem:[#allocation2 + $0x8] sm:$0xff]
        %v748 = vld [vmem:[#allocation2 + $0x10] sm:$0xff]
        %v749 = vld [vmem:[#allocation2 + $0x18] sm:$0xff]
        %753 = vrot.lane.b32.xlu0 %v747, 112
        %v754 = vpop.permute.xlu0 %753
        %755 = vrot.lane.b32.xlu0 %v748, 112
        %v756 = vpop.permute.xlu0 %755
        %757 = vrot.lane.b32.xlu0 %v749, 112
        %v758 = vpop.permute.xlu0 %757
        %v759 = vsel %vm287, %v754, %v756
        %v760 = vsel %vm287, %v756, %v758
        %763 = vst [vmem:[#allocation3 + $0x40] sm:$0xff] %v759
        %764 = vst [vmem:[#allocation3 + $0x48] sm:$0xff] %v760
        %v765 = vld [vmem:[#allocation2 + $0x8] sm:$0xff]
        %v766 = vld [vmem:[#allocation2 + $0x10] sm:$0xff]
        %v767 = vld [vmem:[#allocation2 + $0x18] sm:$0xff]
        %771 = vrot.lane.b32.xlu0 %v765, 96
        %v772 = vpop.permute.xlu0 %771
        %773 = vrot.lane.b32.xlu0 %v766, 96
        %v774 = vpop.permute.xlu0 %773
        %775 = vrot.lane.b32.xlu0 %v767, 96
        %v776 = vpop.permute.xlu0 %775
        %v777 = vsel %vm306, %v772, %v774
        %v778 = vsel %vm306, %v774, %v776
        %781 = vst [vmem:[#allocation3 + $0x50] sm:$0xff] %v777
        %782 = vst [vmem:[#allocation3 + $0x58] sm:$0xff] %v778
        %v783 = vld [vmem:[#allocation2 + $0x8] sm:$0xff]
        %v784 = vld [vmem:[#allocation2 + $0x10] sm:$0xff]
        %v785 = vld [vmem:[#allocation2 + $0x18] sm:$0xff]
        %789 = vrot.lane.b32.xlu0 %v783, 80
        %v790 = vpop.permute.xlu0 %789
        %791 = vrot.lane.b32.xlu0 %v784, 80
        %v792 = vpop.permute.xlu0 %791
        %793 = vrot.lane.b32.xlu0 %v785, 80
        %v794 = vpop.permute.xlu0 %793
        %v795 = vsel %vm325, %v790, %v792
        %v796 = vsel %vm325, %v792, %v794
        %799 = vst [vmem:[#allocation3 + $0x60] sm:$0xff] %v795
        %800 = vst [vmem:[#allocation3 + $0x68] sm:$0xff] %v796
        %v801 = vld [vmem:[#allocation2] sm:$0xff]
        %v802 = vld [vmem:[#allocation2 + $0x8] sm:$0xff]
        %v803 = vld [vmem:[#allocation2 + $0x10] sm:$0xff]
        %v804 = vmul.f32 %v801, %v350
        %v805 = vmul.f32 %v802, %v354
        %v806 = vmul.f32 %v803, %v352
        %810 = vrot.lane.b32.xlu0 %v804, 3
        %v811 = vpop.permute.xlu0 %810
        %812 = vrot.lane.b32.xlu0 %v805, 3
        %v813 = vpop.permute.xlu0 %812
        %814 = vrot.lane.b32.xlu0 %v806, 3
        %v815 = vpop.permute.xlu0 %814
        %v816 = vsel %vm370, %v811, %v813
        %v817 = vsel %vm370, %v813, %v815
        %820 = vst [vmem:[#allocation3 + $0x70] sm:$0xff] %v816
        %821 = vst [vmem:[#allocation3 + $0x78] sm:$0xff] %v817
        %v822 = vld [vmem:[#allocation2] sm:$0xff]
        %v823 = vld [vmem:[#allocation2 + $0x8] sm:$0xff]
        %v824 = vld [vmem:[#allocation2 + $0x10] sm:$0xff]
        %v825 = vmul.f32 %v822, %v395
        %v826 = vmul.f32 %v823, %v399
        %v827 = vmul.f32 %v824, %v397
        %831 = vrot.lane.b32.xlu0 %v825, 2
        %v832 = vpop.permute.xlu0 %831
        %833 = vrot.lane.b32.xlu0 %v826, 2
        %v834 = vpop.permute.xlu0 %833
        %835 = vrot.lane.b32.xlu0 %v827, 2
        %v836 = vpop.permute.xlu0 %835
        %v837 = vsel %vm415, %v832, %v834
        %v838 = vsel %vm415, %v834, %v836
        %841 = vst [vmem:[#allocation3 + $0x80] sm:$0xff] %v837
        %842 = vst [vmem:[#allocation3 + $0x88] sm:$0xff] %v838
        %v843 = vld [vmem:[#allocation2] sm:$0xff]
        %v844 = vld [vmem:[#allocation2 + $0x8] sm:$0xff]
        %v845 = vld [vmem:[#allocation2 + $0x10] sm:$0xff]
        %v846 = vmul.f32 %v843, %v440
        %v847 = vmul.f32 %v844, %v444
        %v848 = vmul.f32 %v845, %v442
        %852 = vrot.lane.b32.xlu0 %v846, 1
        %v853 = vpop.permute.xlu0 %852
        %854 = vrot.lane.b32.xlu0 %v847, 1
        %v855 = vpop.permute.xlu0 %854
        %856 = vrot.lane.b32.xlu0 %v848, 1
        %v857 = vpop.permute.xlu0 %856
        %v858 = vsel %vm460, %v853, %v855
        %v859 = vsel %vm460, %v855, %v857
        %862 = vst [vmem:[#allocation3 + $0x90] sm:$0xff] %v858
        %863 = vst [vmem:[#allocation3 + $0x98] sm:$0xff] %v859
        %v864 = vld [vmem:[#allocation2 + $0x8] sm:$0xff]
        %v865 = vld [vmem:[#allocation2 + $0x10] sm:$0xff]
        %866 = vst [vmem:[#allocation3 + $0xa0] sm:$0xff] %v864
        %867 = vst [vmem:[#allocation3 + $0xa8] sm:$0xff] %v865
        %v868 = vld [vmem:[#allocation2 + $0x8] sm:$0xff]
        %v869 = vld [vmem:[#allocation2 + $0x10] sm:$0xff]
        %v870 = vld [vmem:[#allocation2 + $0x18] sm:$0xff]
        %v871 = vmul.f32 %v868, %v489
        %v872 = vmul.f32 %v869, %v492
        %v873 = vmul.f32 %v870, %v491
        %877 = vrot.lane.b32.xlu0 %v871, 127
        %v878 = vpop.permute.xlu0 %877
        %879 = vrot.lane.b32.xlu0 %v872, 127
        %v880 = vpop.permute.xlu0 %879
        %881 = vrot.lane.b32.xlu0 %v873, 127
        %v882 = vpop.permute.xlu0 %881
        %v883 = vsel %vm443, %v878, %v880
        %v884 = vsel %vm443, %v880, %v882
        %887 = vst [vmem:[#allocation3 + $0xb0] sm:$0xff] %v883
        %888 = vst [vmem:[#allocation3 + $0xb8] sm:$0xff] %v884
        %v889 = vld [vmem:[#allocation2 + $0x8] sm:$0xff]
        %v890 = vld [vmem:[#allocation2 + $0x10] sm:$0xff]
        %v891 = vld [vmem:[#allocation2 + $0x18] sm:$0xff]
        %v892 = vmul.f32 %v889, %v532
        %v893 = vmul.f32 %v890, %v535
        %v894 = vmul.f32 %v891, %v534
        %898 = vrot.lane.b32.xlu0 %v892, 126
        %v899 = vpop.permute.xlu0 %898
        %900 = vrot.lane.b32.xlu0 %v893, 126
        %v901 = vpop.permute.xlu0 %900
        %902 = vrot.lane.b32.xlu0 %v894, 126
        %v903 = vpop.permute.xlu0 %902
        %v904 = vsel %vm398, %v899, %v901
        %v905 = vsel %vm398, %v901, %v903
        %908 = vst [vmem:[#allocation3 + $0xc0] sm:$0xff] %v904
        %909 = vst [vmem:[#allocation3 + $0xc8] sm:$0xff] %v905
        %v910 = vld [vmem:[#allocation2 + $0x8] sm:$0xff]
        %v911 = vld [vmem:[#allocation2 + $0x10] sm:$0xff]
        %v912 = vld [vmem:[#allocation2 + $0x18] sm:$0xff]
        %v913 = vmul.f32 %v910, %v575
        %v914 = vmul.f32 %v911, %v578
        %v915 = vmul.f32 %v912, %v577
        %919 = vrot.lane.b32.xlu0 %v913, 125
        %v920 = vpop.permute.xlu0 %919
        %921 = vrot.lane.b32.xlu0 %v914, 125
        %v922 = vpop.permute.xlu0 %921
        %923 = vrot.lane.b32.xlu0 %v915, 125
        %v924 = vpop.permute.xlu0 %923
        %v925 = vsel %vm353, %v920, %v922
        %v926 = vsel %vm353, %v922, %v924
        %929 = vst [vmem:[#allocation3 + $0xd0] sm:$0xff] %v925
        %930 = vst [vmem:[#allocation3 + $0xd8] sm:$0xff] %v926
        %v931 = vld [vmem:[#allocation3] sm:$0xff]
        %v932 = vld [vmem:[#allocation3 + $0x8] sm:$0xff]
        %v933 = vld [vmem:[#allocation3 + $0x10] sm:$0xff]
        %v934 = vld [vmem:[#allocation3 + $0x18] sm:$0xff]
        %v935 = vld [vmem:[#allocation3 + $0x20] sm:$0xff]
        %v936 = vld [vmem:[#allocation3 + $0x28] sm:$0xff]
        %v937 = vld [vmem:[#allocation3 + $0x30] sm:$0xff]
        %v938 = vld [vmem:[#allocation3 + $0x38] sm:$0xff]
        %v939 = vld [vmem:[#allocation3 + $0x40] sm:$0xff]
        %v940 = vld [vmem:[#allocation3 + $0x48] sm:$0xff]
        %v941 = vld [vmem:[#allocation3 + $0x50] sm:$0xff]
        %v942 = vld [vmem:[#allocation3 + $0x58] sm:$0xff]
        %v943 = vld [vmem:[#allocation3 + $0x60] sm:$0xff]
        %v944 = vld [vmem:[#allocation3 + $0x68] sm:$0xff]
        %v945 = vld [vmem:[#allocation3 + $0x70] sm:$0xff]
        %v946 = vld [vmem:[#allocation3 + $0x78] sm:$0xff]
        %v947 = vld [vmem:[#allocation3 + $0x80] sm:$0xff]
        %v948 = vld [vmem:[#allocation3 + $0x88] sm:$0xff]
        %v949 = vld [vmem:[#allocation3 + $0x90] sm:$0xff]
        %v950 = vld [vmem:[#allocation3 + $0x98] sm:$0xff]
        %v951 = vld [vmem:[#allocation3 + $0xa0] sm:$0xff]
        %v952 = vld [vmem:[#allocation3 + $0xa8] sm:$0xff]
        %v953 = vld [vmem:[#allocation3 + $0xb0] sm:$0xff]
        %v954 = vld [vmem:[#allocation3 + $0xb8] sm:$0xff]
        %v955 = vld [vmem:[#allocation3 + $0xc0] sm:$0xff]
        %v956 = vld [vmem:[#allocation3 + $0xc8] sm:$0xff]
        %v957 = vld [vmem:[#allocation3 + $0xd0] sm:$0xff]
        %v958 = vld [vmem:[#allocation3 + $0xd8] sm:$0xff]
        %v959 = vpack.c.bf16 %v933, %v931
        %v960 = vpack.c.bf16 %v934, %v932
        %v961 = vpack.c.bf16 %v937, %v935
        %v962 = vpack.c.bf16 %v938, %v936
        %v963 = vpack.c.bf16 %v941, %v939
        %v964 = vpack.c.bf16 %v942, %v940
        %v965 = vpack.c.bf16 %v945, %v943
        %v966 = vpack.c.bf16 %v946, %v944
        %v967 = vpack.c.bf16 %v949, %v947
        %v968 = vpack.c.bf16 %v950, %v948
        %v969 = vpack.c.bf16 %v953, %v951
        %v970 = vpack.c.bf16 %v954, %v952
        %v971 = vpack.c.bf16 %v957, %v955
        %v972 = vpack.c.bf16 %v958, %v956
        %v974 = vsel %vm287, %v688, 0
        %976 = vmatprep.subr.bf16.mxu0 %v960
        %977 = vmatpush1.bf16.msra.mxu0 %v959
        %978 = vmatprep.subr.bf16.mxu0 %v962
        %979 = vmatpush1.bf16.msra.mxu0 %v961
        %980 = vmatprep.subr.bf16.mxu0 %v964
        %981 = vmatpush1.bf16.msra.mxu0 %v963
        %982 = vmatprep.subr.bf16.mxu0 %v966
        %983 = vmatpush1.bf16.msra.mxu0 %v965
        %984 = vmatprep.subr.bf16.mxu0 %v968
        %985 = vmatpush1.bf16.msra.mxu0 %v967
        %986 = vmatprep.subr.bf16.mxu0 %v970
        %987 = vmatpush1.bf16.msra.mxu0 %v969
        %988 = vmatprep.subr.bf16.mxu0 %v972
        %989 = vmatpush1.bf16.msra.mxu0 %v971
        %990 = vmatprep.subr.bf16.mxu0 0
        %991 = vmatpush1.bf16.msra.mxu0 0
        %992 = vmatprep.subr.bf16.mxu0 0
        %993 = vmatpush1.bf16.msra.mxu0 0
        %994 = vmatprep.subr.bf16.mxu0 0
        %995 = vmatpush1.bf16.msra.mxu0 0
        %996 = vmatprep.subr.bf16.mxu0 0
        %997 = vmatpush1.bf16.msra.mxu0 0
        %998 = vmatprep.subr.bf16.mxu0 0
        %999 = vmatpush1.bf16.msra.mxu0 0
        %1000 = vmatprep.subr.bf16.mxu0 0
        %1001 = vmatpush1.bf16.msra.mxu0 0
        %1002 = vmatprep.subr.bf16.mxu0 0
        %1003 = vmatpush1.bf16.msra.mxu0 0
        %1004 = vmatprep.subr.bf16.mxu0 0
        %1005 = vmatpush1.bf16.msra.mxu0 0
        %1006 = vmatprep.subr.bf16.mxu0 0
        %1007 = vmatpush1.bf16.msra.mxu0 0
        %1008 = vmatprep.mubr.bf16.mxu0 0
        %1009 = vmatmul.mubr.bf16.gmra.mrb[0].mxu0 %v974
        %v1010 = vpop.f32.mrb[0].mxu0
        %v1011 = vadd.f32 0.0, %v1010
        %v1012 = vpop.f32.mrb[0].mxu0
        %v1013 = vadd.f32 0.0, %v1012
        %v1014 = vpop.f32.mrb[0].mxu0
        %v1015 = vpop.f32.mrb[0].mxu0
        %1016 = vdwg.mxu0
        %v1019 = vcombine.low %v1011, %v1013
        %1021 = vst [vmem:[%s199] sm:$0xff] %v1019
        %s1022 = sand.u32 %s97, 1
        %s1023 = scalar_lea.sflag [#allocation6], %s1022
        %s1024 = sand.u32 %s97, 1
        %s1025 = smul.addr %s1024, 8
        %s1026 = scalar_lea.vmem [#allocation9], %s1025
        // Predicated region
        $region41: #{tpu_custom_call.1} parent=31 // pred_check
          %p1027 = pneg %p107
        $region42: #{tpu_custom_call.1} parent=31 // pred_check_branch
          %1029 = sbr.rel (%p1027) target = $region44
        $region43: #{tpu_custom_call.1} parent=31 // pred_region
          %s1031 = ssub.s32 128, 128
          %1032 = vsyncadd %s1023, %s1031
          %s1033 = smul.addr %s21, 2
          %s1034 = smul.addr %s1033, 64
          %s1035 = scalar_lea.hbm %s3, %s1034
          %s1037 = sshll.u32 %s1026, 4
          %s1038 = int_to_ptr.vmem [resolvable:$true] %s1037
          %1040 = dma.vmem_to_hbm [thread:$0]  %s1038, 128, %s1035, %s1023
        $region44: #{tpu_custom_call.1} parent=31 // pred_fallthru
          _
      $region32: #{tpu_custom_call.1} parent=5 // pred_fallthru
        _
      %p1041 = scmp.le.s32.totalorder 2, %s16
      // Predicated region
      $region45: #{tpu_custom_call.1} parent=5 // pred_check
        %p1042 = pneg %p1041
      $region46: #{tpu_custom_call.1} parent=5 // pred_check_branch
        %1044 = sbr.rel (%p1042) target = $region48
      $region47: #{tpu_custom_call.1} parent=5 // pred_region
        %s1045 = ssub.s32 %s16, 2
        // Predicated region
        $region49: #{tpu_custom_call.1} parent=47 // pred_check
          %p1046 = pneg %p113
        $region50: #{tpu_custom_call.1} parent=47 // pred_check_branch
          %1048 = sbr.rel (%p1046) target = $region52
        $region51: #{tpu_custom_call.1} parent=47 // pred_region
          %s1049 = sand.u32 %s98, 1
          %s1050 = scalar_lea.sflag [#allocation6], %s1049
          %s1051 = sand.u32 %s98, 1
          %s1052 = smul.addr %s1051, 8
          %s1053 = scalar_lea.vmem [#allocation9], %s1052
          %1054 = dma.done %s1050, 128
        $region52: #{tpu_custom_call.1} parent=47 // pred_fallthru
          _
      $region48: #{tpu_custom_call.1} parent=5 // pred_fallthru
        _
    $region6: #{tpu_custom_call.1} parent=1 // loop_footer
      %s20 = sadd.s32 1, %s16
    $region7: #{tpu_custom_call.1} parent=1 // loop_footer_branch
      %15 = sbr.rel target = $region3
    $region8: #{tpu_custom_call.1} parent=1 // loop_exit
      _
    %1055 = vsyncpa [#allocation5], 1
    %s1056 = scalar_lea.sflag [#allocation5], 1
    %1057 = vsyncpa %s1056, 1
    %1058 = vsyncpa [#allocation8], 1
    %1059 = vsyncpa [#allocation6], 1
    %s1060 = scalar_lea.sflag [#allocation6], 1
    %1061 = vsyncpa %s1060, 1

</llo_original>
